<compile_context>
chip_gen: v7x
topology: tpu7x:2x2x1
jax: 0.10.0
libtpu: 0.0.40
codegen_flags: <defaults>
</compile_context>

<pallas_src>
import functools

import jax
import jax.numpy as jnp
from jax import lax
from jax.experimental import pallas as pl
from jax.experimental.pallas import tpu as pltpu

LN_EPS = 1e-5  # torch.nn.LayerNorm default


def encoder_block_kernel(x_ref, ln1g_ref, ln1b_ref,
                         wqkv_ref, bqkv_ref, wo_ref, bo_ref,
                         ln2g_ref, ln2b_ref,
                         w1_ref, b1_ref, w2_ref, b2_ref,
                         out_ref, *, num_heads, head_dim, seq_len):
    N, D = x_ref.shape                     # N = batch_tile * seq_len rows
    H, dh, S = num_heads, head_dim, seq_len
    Bt = N // S                            # batch elements in this grid step

    x = x_ref[...]                         # (N, D) f32

    def layer_norm(v, g, b):
        # One-pass variance: E[v^2] - mu^2 (review micro-opt).
        mu = jnp.mean(v, axis=-1, keepdims=True)
        msq = jnp.mean(v * v, axis=-1, keepdims=True)
        var = jnp.maximum(msq - mu * mu, 0.0)
        return (v - mu) * lax.rsqrt(var + LN_EPS) * g + b

    # ---- LayerNorm 1 (f32 element-wise) -------------------------------------
    h1 = layer_norm(x, ln1g_ref[0], ln1b_ref[0])

    # ---- Fused QKV projection (bf16 operands, f32 accumulation) -------------
    # 1/sqrt(head_dim) is already folded into the Q columns of wqkv / bqkv.
    qkv = jnp.dot(h1.astype(jnp.bfloat16), wqkv_ref[...],
                  preferred_element_type=jnp.float32) + bqkv_ref[0]   # (N, 3D)
    qkv_bf = qkv.astype(jnp.bfloat16)      # single bf16 cast before head split

    # Single (S, S) causal mask, built once and broadcast over the batch dim
    # (replaces the old (H*Bt*S)^2 iota + div/mod mask).
    row = lax.broadcasted_iota(jnp.int32, (S, S), 0)
    col = lax.broadcasted_iota(jnp.int32, (S, S), 1)
    causal = (row >= col)[None, :, :]      # (1, S, S); ut_mask == strictly upper
    neg_inf = jnp.float32(-1e30)

    # ---- Multi-head attention: batched per-(head, batch) matmuls ------------
    head_outs = []
    for h in range(H):                     # short unrolled loop; each dot is useful work
        qh = qkv_bf[:, h * dh:(h + 1) * dh].reshape(Bt, S, dh)
        kh = qkv_bf[:, D + h * dh:D + (h + 1) * dh].reshape(Bt, S, dh)
        vh = qkv_bf[:, 2 * D + h * dh:2 * D + (h + 1) * dh].reshape(Bt, S, dh)

        s = jnp.einsum('bqd,bkd->bqk', qh, kh,
                       preferred_element_type=jnp.float32)            # (Bt, S, S)
        s = jnp.where(causal, s, neg_inf)
        s = s - jnp.max(s, axis=-1, keepdims=True)
        p = jnp.exp(s)                                                 # f32 softmax
        p = p * pl.reciprocal(jnp.sum(p, axis=-1, keepdims=True), approx=True)

        oh = jnp.einsum('bqk,bkd->bqd', p.astype(jnp.bfloat16), vh,
                        preferred_element_type=jnp.float32)            # (Bt, S, dh)
        head_outs.append(oh.reshape(N, dh))                            # free leading merge

    # Merge heads back along lanes -> (N, D); single full-width out-projection.
    o = jnp.concatenate(head_outs, axis=1)
    attn = jnp.dot(o.astype(jnp.bfloat16), wo_ref[...],
                   preferred_element_type=jnp.float32) + bo_ref[0]

    # TODO(synk): dropout1 / dropout2 / attention-dropout are identity (eval mode).
    m = attn + h1                # skip from post-LN1 output (skip_out = out after layer_norm1)

    # ---- LayerNorm 2 ---------------------------------------------------------
    h2 = layer_norm(m, ln2g_ref[0], ln2b_ref[0])

    # ---- transformer_FFN: Linear -> ReLU -> Linear, then skip ----------------
    f = jnp.dot(h2.astype(jnp.bfloat16), w1_ref[...],
                preferred_element_type=jnp.float32) + b1_ref[0]
    f = jnp.maximum(f, 0.0)
    f = jnp.dot(f.astype(jnp.bfloat16), w2_ref[...],
                preferred_element_type=jnp.float32) + b2_ref[0]
    out_ref[...] = f + h2        # skip from post-LN2 output (skip_out = out after layer_norm2)


def _pick_tiling(batch):
    """Chip-aware batch tile / scoped-VMEM limit.

    v7x-class (<=64 MiB VMEM per TC, 2 TensorCores): split the batch so the
    'parallel' grid axis shards across both cores, and keep the scoped limit
    at 32 MiB per step.  v5e/v6e (128 MiB physical): one big step, raise the
    scoped limit past the 16/32 MiB defaults.
    """
    vmem = None
    try:
        vmem = getattr(pltpu.get_tpu_info(), "vmem_capacity_bytes", None)
    except Exception:
        vmem = None
    if vmem is not None and vmem <= (64 << 20):
        bt = batch // 2 if (batch % 2 == 0 and batch >= 2) else batch
        limit = 32 << 20
    else:
        bt = batch
        limit = 64 << 20
    return bt, limit


def encoder_block_apply(params, in_ex, in_cat, in_pos, num_heads, batch_tile=None):
    # Glue (plain JAX): embedding gathers + positional add (first_block=True, 'qid').
    x = params["emb_q"][in_ex] + params["emb_c"][in_cat] + in_pos
    x = x.astype(jnp.float32)
    B, S, D = x.shape
    assert D % num_heads == 0, "dim_model must be divisible by heads_en"
    head_dim = D // num_heads

    auto_bt, vmem_limit = _pick_tiling(B)
    Bt = auto_bt if batch_tile is None else batch_tile
    assert B % Bt == 0
    rows = Bt * S

    # Fold the 1/sqrt(head_dim) softmax scale into the Q projection, and cast
    # the matmul weights to bf16 (biases / LN params stay f32).
    scale = 1.0 / (head_dim ** 0.5)
    col_scale = jnp.concatenate([jnp.full((D,), scale, jnp.float32),
                                 jnp.ones((2 * D,), jnp.float32)])
    wqkv = (params["wqkv"] * col_scale[None, :]).astype(jnp.bfloat16)
    bqkv = params["bqkv"] * col_scale[None, :]

    weights = [
        params["ln1_g"], params["ln1_b"],
        wqkv, bqkv,
        params["wo"].astype(jnp.bfloat16), params["bo"],
        params["ln2_g"], params["ln2_b"],
        params["w1"].astype(jnp.bfloat16), params["b1"],
        params["w2"].astype(jnp.bfloat16), params["b2"],
    ]

    def full_spec(a):
        return pl.BlockSpec(a.shape, lambda b: (0,) * a.ndim)

    kernel = functools.partial(encoder_block_kernel, num_heads=num_heads,
                               head_dim=head_dim, seq_len=S)

    # Lane-dense 2D I/O: a (rows, D) slab per grid step; the (B,S,D)<->(B*S,D)
    # reshapes live in the wrapper (free in XLA), so the kernel never relayouts
    # its input/output slabs.
    out2 = pl.pallas_call(
        kernel,
        out_shape=jax.ShapeDtypeStruct((B * S, D), jnp.float32),
        grid=(B // Bt,),
        in_specs=[pl.BlockSpec((rows, D), lambda b: (b, 0))]
                 + [full_spec(w) for w in weights],
        out_specs=pl.BlockSpec((rows, D), lambda b: (b, 0)),
        compiler_params=pltpu.CompilerParams(
            dimension_semantics=("parallel",),
            vmem_limit_bytes=vmem_limit),
    )(x.reshape(B * S, D), *weights)
    return out2.reshape(B, S, D)


def init_params(key, num_q, num_c, dim_model):
    D = dim_model
    ks = jax.random.split(key, 10)

    def unif(k, shape, scale=0.1):
        return jax.random.uniform(k, shape, jnp.float32, -scale, scale)

    # Weights are stored in x @ W orientation (i.e. PyTorch Linear weight^T).
    return dict(
        emb_q=unif(ks[0], (num_q, D), 1.0),
        emb_c=unif(ks[1], (num_c, D), 1.0),
        ln1_g=jnp.ones((1, D), jnp.float32),
        ln1_b=jnp.zeros((1, D), jnp.float32),
        wqkv=unif(ks[2], (D, 3 * D)),
        bqkv=unif(ks[3], (1, 3 * D)),
        wo=unif(ks[4], (D, D)),
        bo=unif(ks[5], (1, D)),
        ln2_g=jnp.ones((1, D), jnp.float32),
        ln2_b=jnp.zeros((1, D), jnp.float32),
        w1=unif(ks[6], (D, D)),
        b1=unif(ks[7], (1, D)),
        w2=unif(ks[8], (D, D)),
        b2=unif(ks[9], (1, D)),
    )


def reference(params, in_ex, in_cat, in_pos, num_heads):
    """Pure-JAX f32 replica of Encoder_block.forward (eval mode, 'qid')."""
    x = params["emb_q"][in_ex] + params["emb_c"][in_cat] + in_pos
    B, S, D = x.shape
    dh = D // num_heads

    def ln(v, g, b):
        mu = v.mean(-1, keepdims=True)
        var = ((v - mu) ** 2).mean(-1, keepdims=True)
        return (v - mu) / jnp.sqrt(var + LN_EPS) * g[0] + b[0]

    h1 = ln(x, params["ln1_g"], params["ln1_b"])
    qkv = h1 @ params["wqkv"] + params["bqkv"][0]
    q, k, v = jnp.split(qkv, 3, axis=-1)
    q = q.reshape(B, S, num_heads, dh).transpose(0, 2, 1, 3)
    k = k.reshape(B, S, num_heads, dh).transpose(0, 2, 1, 3)
    v = v.reshape(B, S, num_heads, dh).transpose(0, 2, 1, 3)
    s = jnp.einsum("bhqd,bhkd->bhqk", q, k) / jnp.sqrt(dh)
    mask = jnp.triu(jnp.ones((S, S), bool), 1)          # ut_mask
    s = jnp.where(mask, -1e30, s)
    p = jax.nn.softmax(s, axis=-1)
    o = jnp.einsum("bhqk,bhkd->bhqd", p, v).transpose(0, 2, 1, 3).reshape(B, S, D)
    o = o @ params["wo"] + params["bo"][0]
    m = o + h1
    h2 = ln(m, params["ln2_g"], params["ln2_b"])
    f = jnp.maximum(h2 @ params["w1"] + params["b1"][0], 0.0)
    f = f @ params["w2"] + params["b2"][0]
    return f + h2


if __name__ == "__main__":
    # Small but structurally faithful SAINT shapes (pykt defaults are
    # dim_model=256, heads=8, seq_len=200); D=128 keeps all I/O lane-dense.
    B, S, D, H = 2, 16, 128, 4        # batch, seq_len, dim_model, heads_en
    num_q, num_c = 50, 20

    key = jax.random.PRNGKey(0)
    kp, k1, k2, k3 = jax.random.split(key, 4)
    params = init_params(kp, num_q, num_c, D)

    in_ex = jax.random.randint(k1, (B, S), 0, num_q, dtype=jnp.int32)
    in_cat = jax.random.randint(k2, (B, S), 0, num_c, dtype=jnp.int32)
    in_pos = jax.random.uniform(k3, (B, S, D), jnp.float32, -0.5, 0.5)

    out = encoder_block_apply(params, in_ex, in_cat, in_pos, H)
    out = jax.block_until_ready(out)

    ref = reference(params, in_ex, in_cat, in_pos, H)
    assert out.shape == (B, S, D)
    # Tolerance accounts for bf16 MXU operands (f32 accumulation) vs f32 reference.
    max_err = float(jnp.max(jnp.abs(out - ref)))
    assert jnp.allclose(out, ref, atol=5e-2, rtol=5e-2), \
        f"mismatch vs. reference (max abs err {max_err})"

    print("KERNEL_OK")
</pallas_src>

<mosaic_0001>
module attributes {stable_mosaic.version = 11 : i64} {
  func.func @encoder_block_kernel(%arg0: i32, %arg1: memref<32x128xf32, #tpu.memory_space<vmem>>, %arg2: memref<1x128xf32, #tpu.memory_space<vmem>>, %arg3: memref<1x128xf32, #tpu.memory_space<vmem>>, %arg4: memref<128x384xbf16, #tpu.memory_space<vmem>>, %arg5: memref<1x384xf32, #tpu.memory_space<vmem>>, %arg6: memref<128x128xbf16, #tpu.memory_space<vmem>>, %arg7: memref<1x128xf32, #tpu.memory_space<vmem>>, %arg8: memref<1x128xf32, #tpu.memory_space<vmem>>, %arg9: memref<1x128xf32, #tpu.memory_space<vmem>>, %arg10: memref<128x128xbf16, #tpu.memory_space<vmem>>, %arg11: memref<1x128xf32, #tpu.memory_space<vmem>>, %arg12: memref<128x128xbf16, #tpu.memory_space<vmem>>, %arg13: memref<1x128xf32, #tpu.memory_space<vmem>>, %arg14: memref<32x128xf32, #tpu.memory_space<vmem>>) attributes {dimension_semantics = [#tpu.dimension_semantics<parallel>], iteration_bounds = array<i64: 1>, scalar_prefetch = 0 : i64, scratch_operands = 0 : i64, tpu.core_type = #tpu.core_type<tc>, window_params = [{transform_indices = @transform_0, window_bounds = array<i64: 32, 128>}, {pipeline_mode = #tpu.pipeline_mode<synchronous>, transform_indices = @transform_1, window_bounds = array<i64: 1, 128>}, {pipeline_mode = #tpu.pipeline_mode<synchronous>, transform_indices = @transform_2, window_bounds = array<i64: 1, 128>}, {pipeline_mode = #tpu.pipeline_mode<synchronous>, transform_indices = @transform_3, window_bounds = array<i64: 128, 384>}, {pipeline_mode = #tpu.pipeline_mode<synchronous>, transform_indices = @transform_4, window_bounds = array<i64: 1, 384>}, {pipeline_mode = #tpu.pipeline_mode<synchronous>, transform_indices = @transform_5, window_bounds = array<i64: 128, 128>}, {pipeline_mode = #tpu.pipeline_mode<synchronous>, transform_indices = @transform_6, window_bounds = array<i64: 1, 128>}, {pipeline_mode = #tpu.pipeline_mode<synchronous>, transform_indices = @transform_7, window_bounds = array<i64: 1, 128>}, {pipeline_mode = #tpu.pipeline_mode<synchronous>, transform_indices = @transform_8, window_bounds = array<i64: 1, 128>}, {pipeline_mode = #tpu.pipeline_mode<synchronous>, transform_indices = @transform_9, window_bounds = array<i64: 128, 128>}, {pipeline_mode = #tpu.pipeline_mode<synchronous>, transform_indices = @transform_10, window_bounds = array<i64: 1, 128>}, {pipeline_mode = #tpu.pipeline_mode<synchronous>, transform_indices = @transform_11, window_bounds = array<i64: 128, 128>}, {pipeline_mode = #tpu.pipeline_mode<synchronous>, transform_indices = @transform_12, window_bounds = array<i64: 1, 128>}, {transform_indices = @transform_13, window_bounds = array<i64: 32, 128>}]} {
    %c0 = arith.constant 0 : index
    %c0_0 = arith.constant 0 : index
    %0 = vector.load %arg1[%c0, %c0_0] : memref<32x128xf32, #tpu.memory_space<vmem>>, vector<32x128xf32>
    %c0_1 = arith.constant 0 : index
    %c0_2 = arith.constant 0 : index
    %1 = vector.load %arg2[%c0_1, %c0_2] : memref<1x128xf32, #tpu.memory_space<vmem>>, vector<1x128xf32>
    %2 = vector.shape_cast %1 : vector<1x128xf32> to vector<128xf32>
    %c0_3 = arith.constant 0 : index
    %c0_4 = arith.constant 0 : index
    %3 = vector.load %arg3[%c0_3, %c0_4] : memref<1x128xf32, #tpu.memory_space<vmem>>, vector<1x128xf32>
    %4 = vector.shape_cast %3 : vector<1x128xf32> to vector<128xf32>
    %cst = arith.constant dense<0.000000e+00> : vector<32xf32>
    %5 = vector.multi_reduction <add>, %0, %cst [1] : vector<32x128xf32> to vector<32xf32>
    %6 = vector.shape_cast %5 : vector<32xf32> to vector<32x1xf32>
    %cst_5 = arith.constant 1.280000e+02 : f32
    %7 = vector.broadcast %cst_5 : f32 to vector<32x1xf32>
    %8 = arith.divf %6, %7 : vector<32x1xf32>
    %9 = arith.mulf %0, %0 : vector<32x128xf32>
    %cst_6 = arith.constant dense<0.000000e+00> : vector<32xf32>
    %10 = vector.multi_reduction <add>, %9, %cst_6 [1] : vector<32x128xf32> to vector<32xf32>
    %11 = vector.shape_cast %10 : vector<32xf32> to vector<32x1xf32>
    %cst_7 = arith.constant 1.280000e+02 : f32
    %12 = vector.broadcast %cst_7 : f32 to vector<32x1xf32>
    %13 = arith.divf %11, %12 : vector<32x1xf32>
    %14 = arith.mulf %8, %8 : vector<32x1xf32>
    %15 = arith.subf %13, %14 : vector<32x1xf32>
    %cst_8 = arith.constant 0.000000e+00 : f32
    %16 = vector.broadcast %cst_8 : f32 to vector<32x1xf32>
    %17 = arith.maximumf %15, %16 : vector<32x1xf32>
    %18 = vector.broadcast %8 : vector<32x1xf32> to vector<32x128xf32>
    %19 = arith.subf %0, %18 : vector<32x128xf32>
    %cst_9 = arith.constant 9.99999974E-6 : f32
    %20 = vector.broadcast %cst_9 : f32 to vector<32x1xf32>
    %21 = arith.addf %17, %20 : vector<32x1xf32>
    %22 = math.rsqrt %21 : vector<32x1xf32>
    %23 = vector.broadcast %22 : vector<32x1xf32> to vector<32x128xf32>
    %24 = arith.mulf %19, %23 : vector<32x128xf32>
    %25 = vector.shape_cast %2 : vector<128xf32> to vector<1x128xf32>
    %26 = vector.broadcast %25 : vector<1x128xf32> to vector<32x128xf32>
    %27 = arith.mulf %24, %26 : vector<32x128xf32>
    %28 = vector.shape_cast %4 : vector<128xf32> to vector<1x128xf32>
    %29 = vector.broadcast %28 : vector<1x128xf32> to vector<32x128xf32>
    %30 = arith.addf %27, %29 : vector<32x128xf32>
    %31 = arith.truncf %30 : vector<32x128xf32> to vector<32x128xbf16>
    %c0_10 = arith.constant 0 : index
    %c0_11 = arith.constant 0 : index
    %32 = vector.load %arg4[%c0_10, %c0_11] : memref<128x384xbf16, #tpu.memory_space<vmem>>, vector<128x384xbf16>
    %cst_12 = arith.constant dense<0.000000e+00> : vector<32x384xf32>
    %33 = tpu.matmul %31, %32, %cst_12 {dimension_numbers = #tpu.dot_dimension_numbers<[1], [0], [0], [1], [0, 0, 1, 1], [], []>} : vector<32x128xbf16>, vector<128x384xbf16>, vector<32x384xf32> -> vector<32x384xf32>
    %c0_13 = arith.constant 0 : index
    %c0_14 = arith.constant 0 : index
    %34 = vector.load %arg5[%c0_13, %c0_14] : memref<1x384xf32, #tpu.memory_space<vmem>>, vector<1x384xf32>
    %35 = vector.shape_cast %34 : vector<1x384xf32> to vector<384xf32>
    %36 = vector.shape_cast %35 : vector<384xf32> to vector<1x384xf32>
    %37 = vector.broadcast %36 : vector<1x384xf32> to vector<32x384xf32>
    %38 = arith.addf %33, %37 : vector<32x384xf32>
    %39 = arith.truncf %38 : vector<32x384xf32> to vector<32x384xbf16>
    %40 = tpu.iota {dimensions = array<i32: 0>} : vector<16x16xi32>
    %41 = tpu.iota {dimensions = array<i32: 1>} : vector<16x16xi32>
    %42 = arith.cmpi sge, %40, %41 : vector<16x16xi32>
    %43 = vector.shape_cast %42 : vector<16x16xi1> to vector<1x16x16xi1>
    %44 = vector.extract_strided_slice %39 {offsets = [0, 0], sizes = [32, 32], strides = [1, 1]} : vector<32x384xbf16> to vector<32x32xbf16>
    %45 = vector.shape_cast %44 : vector<32x32xbf16> to vector<2x16x32xbf16>
    %46 = vector.extract_strided_slice %39 {offsets = [0, 128], sizes = [32, 32], strides = [1, 1]} : vector<32x384xbf16> to vector<32x32xbf16>
    %47 = vector.shape_cast %46 : vector<32x32xbf16> to vector<2x16x32xbf16>
    %48 = vector.extract_strided_slice %39 {offsets = [0, 256], sizes = [32, 32], strides = [1, 1]} : vector<32x384xbf16> to vector<32x32xbf16>
    %49 = vector.shape_cast %48 : vector<32x32xbf16> to vector<2x16x32xbf16>
    "tpu.trace_start"() <{level = 10 : i32, message = "bqd,bkd->bqk"}> : () -> ()
    %cst_15 = arith.constant dense<0.000000e+00> : vector<2x16x16xf32>
    %50 = tpu.matmul %45, %47, %cst_15 {dimension_numbers = #tpu.dot_dimension_numbers<[2], [2], [1], [1], [0, 0, 0, 1, 1, 1], [0], [0]>} : vector<2x16x32xbf16>, vector<2x16x32xbf16>, vector<2x16x16xf32> -> vector<2x16x16xf32>
    %cst_16 = arith.constant -1.000000e+30 : f32
    "tpu.trace_stop"() : () -> ()
    %51 = vector.shape_cast %43 : vector<1x16x16xi1> to vector<1x16x16xi1>
    %52 = vector.broadcast %51 : vector<1x16x16xi1> to vector<2x16x16xi1>
    %53 = vector.broadcast %cst_16 : f32 to vector<2x16x16xf32>
    %54 = arith.select %52, %50, %53 : vector<2x16x16xi1>, vector<2x16x16xf32>
    %cst_17 = arith.constant dense<0xFF800000> : vector<2x16xf32>
    %55 = vector.multi_reduction <maximumf>, %54, %cst_17 [2] : vector<2x16x16xf32> to vector<2x16xf32>
    %56 = vector.shape_cast %55 : vector<2x16xf32> to vector<2x16x1xf32>
    %57 = vector.broadcast %56 : vector<2x16x1xf32> to vector<2x16x16xf32>
    %58 = arith.subf %54, %57 : vector<2x16x16xf32>
    %59 = math.exp %58 : vector<2x16x16xf32>
    %cst_18 = arith.constant dense<0.000000e+00> : vector<2x16xf32>
    %60 = vector.multi_reduction <add>, %59, %cst_18 [2] : vector<2x16x16xf32> to vector<2x16xf32>
    %61 = vector.shape_cast %60 : vector<2x16xf32> to vector<2x16x1xf32>
    %62 = tpu.reciprocal %61 {approx = true} : vector<2x16x1xf32> -> vector<2x16x1xf32>
    %63 = vector.broadcast %62 : vector<2x16x1xf32> to vector<2x16x16xf32>
    %64 = arith.mulf %59, %63 : vector<2x16x16xf32>
    %65 = arith.truncf %64 : vector<2x16x16xf32> to vector<2x16x16xbf16>
    "tpu.trace_start"() <{level = 10 : i32, message = "bqk,bkd->bqd"}> : () -> ()
    %cst_19 = arith.constant dense<0.000000e+00> : vector<2x16x32xf32>
    %66 = tpu.matmul %65, %49, %cst_19 {dimension_numbers = #tpu.dot_dimension_numbers<[2], [1], [1], [2], [0, 0, 0, 1, 1, 2], [0], [0]>} : vector<2x16x16xbf16>, vector<2x16x32xbf16>, vector<2x16x32xf32> -> vector<2x16x32xf32>
    "tpu.trace_stop"() : () -> ()
    %67 = vector.shape_cast %66 : vector<2x16x32xf32> to vector<32x32xf32>
    %68 = vector.extract_strided_slice %39 {offsets = [0, 32], sizes = [32, 32], strides = [1, 1]} : vector<32x384xbf16> to vector<32x32xbf16>
    %69 = vector.shape_cast %68 : vector<32x32xbf16> to vector<2x16x32xbf16>
    %70 = vector.extract_strided_slice %39 {offsets = [0, 160], sizes = [32, 32], strides = [1, 1]} : vector<32x384xbf16> to vector<32x32xbf16>
    %71 = vector.shape_cast %70 : vector<32x32xbf16> to vector<2x16x32xbf16>
    %72 = vector.extract_strided_slice %39 {offsets = [0, 288], sizes = [32, 32], strides = [1, 1]} : vector<32x384xbf16> to vector<32x32xbf16>
    %73 = vector.shape_cast %72 : vector<32x32xbf16> to vector<2x16x32xbf16>
    "tpu.trace_start"() <{level = 10 : i32, message = "bqd,bkd->bqk"}> : () -> ()
    %cst_20 = arith.constant dense<0.000000e+00> : vector<2x16x16xf32>
    %74 = tpu.matmul %69, %71, %cst_20 {dimension_numbers = #tpu.dot_dimension_numbers<[2], [2], [1], [1], [0, 0, 0, 1, 1, 1], [0], [0]>} : vector<2x16x32xbf16>, vector<2x16x32xbf16>, vector<2x16x16xf32> -> vector<2x16x16xf32>
    %cst_21 = arith.constant -1.000000e+30 : f32
    "tpu.trace_stop"() : () -> ()
    %75 = vector.shape_cast %43 : vector<1x16x16xi1> to vector<1x16x16xi1>
    %76 = vector.broadcast %75 : vector<1x16x16xi1> to vector<2x16x16xi1>
    %77 = vector.broadcast %cst_21 : f32 to vector<2x16x16xf32>
    %78 = arith.select %76, %74, %77 : vector<2x16x16xi1>, vector<2x16x16xf32>
    %cst_22 = arith.constant dense<0xFF800000> : vector<2x16xf32>
    %79 = vector.multi_reduction <maximumf>, %78, %cst_22 [2] : vector<2x16x16xf32> to vector<2x16xf32>
    %80 = vector.shape_cast %79 : vector<2x16xf32> to vector<2x16x1xf32>
    %81 = vector.broadcast %80 : vector<2x16x1xf32> to vector<2x16x16xf32>
    %82 = arith.subf %78, %81 : vector<2x16x16xf32>
    %83 = math.exp %82 : vector<2x16x16xf32>
    %cst_23 = arith.constant dense<0.000000e+00> : vector<2x16xf32>
    %84 = vector.multi_reduction <add>, %83, %cst_23 [2] : vector<2x16x16xf32> to vector<2x16xf32>
    %85 = vector.shape_cast %84 : vector<2x16xf32> to vector<2x16x1xf32>
    %86 = tpu.reciprocal %85 {approx = true} : vector<2x16x1xf32> -> vector<2x16x1xf32>
    %87 = vector.broadcast %86 : vector<2x16x1xf32> to vector<2x16x16xf32>
    %88 = arith.mulf %83, %87 : vector<2x16x16xf32>
    %89 = arith.truncf %88 : vector<2x16x16xf32> to vector<2x16x16xbf16>
    "tpu.trace_start"() <{level = 10 : i32, message = "bqk,bkd->bqd"}> : () -> ()
    %cst_24 = arith.constant dense<0.000000e+00> : vector<2x16x32xf32>
    %90 = tpu.matmul %89, %73, %cst_24 {dimension_numbers = #tpu.dot_dimension_numbers<[2], [1], [1], [2], [0, 0, 0, 1, 1, 2], [0], [0]>} : vector<2x16x16xbf16>, vector<2x16x32xbf16>, vector<2x16x32xf32> -> vector<2x16x32xf32>
    "tpu.trace_stop"() : () -> ()
    %91 = vector.shape_cast %90 : vector<2x16x32xf32> to vector<32x32xf32>
    %92 = vector.extract_strided_slice %39 {offsets = [0, 64], sizes = [32, 32], strides = [1, 1]} : vector<32x384xbf16> to vector<32x32xbf16>
    %93 = vector.shape_cast %92 : vector<32x32xbf16> to vector<2x16x32xbf16>
    %94 = vector.extract_strided_slice %39 {offsets = [0, 192], sizes = [32, 32], strides = [1, 1]} : vector<32x384xbf16> to vector<32x32xbf16>
    %95 = vector.shape_cast %94 : vector<32x32xbf16> to vector<2x16x32xbf16>
    %96 = vector.extract_strided_slice %39 {offsets = [0, 320], sizes = [32, 32], strides = [1, 1]} : vector<32x384xbf16> to vector<32x32xbf16>
    %97 = vector.shape_cast %96 : vector<32x32xbf16> to vector<2x16x32xbf16>
    "tpu.trace_start"() <{level = 10 : i32, message = "bqd,bkd->bqk"}> : () -> ()
    %cst_25 = arith.constant dense<0.000000e+00> : vector<2x16x16xf32>
    %98 = tpu.matmul %93, %95, %cst_25 {dimension_numbers = #tpu.dot_dimension_numbers<[2], [2], [1], [1], [0, 0, 0, 1, 1, 1], [0], [0]>} : vector<2x16x32xbf16>, vector<2x16x32xbf16>, vector<2x16x16xf32> -> vector<2x16x16xf32>
    %cst_26 = arith.constant -1.000000e+30 : f32
    "tpu.trace_stop"() : () -> ()
    %99 = vector.shape_cast %43 : vector<1x16x16xi1> to vector<1x16x16xi1>
    %100 = vector.broadcast %99 : vector<1x16x16xi1> to vector<2x16x16xi1>
    %101 = vector.broadcast %cst_26 : f32 to vector<2x16x16xf32>
    %102 = arith.select %100, %98, %101 : vector<2x16x16xi1>, vector<2x16x16xf32>
    %cst_27 = arith.constant dense<0xFF800000> : vector<2x16xf32>
    %103 = vector.multi_reduction <maximumf>, %102, %cst_27 [2] : vector<2x16x16xf32> to vector<2x16xf32>
    %104 = vector.shape_cast %103 : vector<2x16xf32> to vector<2x16x1xf32>
    %105 = vector.broadcast %104 : vector<2x16x1xf32> to vector<2x16x16xf32>
    %106 = arith.subf %102, %105 : vector<2x16x16xf32>
    %107 = math.exp %106 : vector<2x16x16xf32>
    %cst_28 = arith.constant dense<0.000000e+00> : vector<2x16xf32>
    %108 = vector.multi_reduction <add>, %107, %cst_28 [2] : vector<2x16x16xf32> to vector<2x16xf32>
    %109 = vector.shape_cast %108 : vector<2x16xf32> to vector<2x16x1xf32>
    %110 = tpu.reciprocal %109 {approx = true} : vector<2x16x1xf32> -> vector<2x16x1xf32>
    %111 = vector.broadcast %110 : vector<2x16x1xf32> to vector<2x16x16xf32>
    %112 = arith.mulf %107, %111 : vector<2x16x16xf32>
    %113 = arith.truncf %112 : vector<2x16x16xf32> to vector<2x16x16xbf16>
    "tpu.trace_start"() <{level = 10 : i32, message = "bqk,bkd->bqd"}> : () -> ()
    %cst_29 = arith.constant dense<0.000000e+00> : vector<2x16x32xf32>
    %114 = tpu.matmul %113, %97, %cst_29 {dimension_numbers = #tpu.dot_dimension_numbers<[2], [1], [1], [2], [0, 0, 0, 1, 1, 2], [0], [0]>} : vector<2x16x16xbf16>, vector<2x16x32xbf16>, vector<2x16x32xf32> -> vector<2x16x32xf32>
    "tpu.trace_stop"() : () -> ()
    %115 = vector.shape_cast %114 : vector<2x16x32xf32> to vector<32x32xf32>
    %116 = vector.extract_strided_slice %39 {offsets = [0, 96], sizes = [32, 32], strides = [1, 1]} : vector<32x384xbf16> to vector<32x32xbf16>
    %117 = vector.shape_cast %116 : vector<32x32xbf16> to vector<2x16x32xbf16>
    %118 = vector.extract_strided_slice %39 {offsets = [0, 224], sizes = [32, 32], strides = [1, 1]} : vector<32x384xbf16> to vector<32x32xbf16>
    %119 = vector.shape_cast %118 : vector<32x32xbf16> to vector<2x16x32xbf16>
    %120 = vector.extract_strided_slice %39 {offsets = [0, 352], sizes = [32, 32], strides = [1, 1]} : vector<32x384xbf16> to vector<32x32xbf16>
    %121 = vector.shape_cast %120 : vector<32x32xbf16> to vector<2x16x32xbf16>
    "tpu.trace_start"() <{level = 10 : i32, message = "bqd,bkd->bqk"}> : () -> ()
    %cst_30 = arith.constant dense<0.000000e+00> : vector<2x16x16xf32>
    %122 = tpu.matmul %117, %119, %cst_30 {dimension_numbers = #tpu.dot_dimension_numbers<[2], [2], [1], [1], [0, 0, 0, 1, 1, 1], [0], [0]>} : vector<2x16x32xbf16>, vector<2x16x32xbf16>, vector<2x16x16xf32> -> vector<2x16x16xf32>
    %cst_31 = arith.constant -1.000000e+30 : f32
    "tpu.trace_stop"() : () -> ()
    %123 = vector.shape_cast %43 : vector<1x16x16xi1> to vector<1x16x16xi1>
    %124 = vector.broadcast %123 : vector<1x16x16xi1> to vector<2x16x16xi1>
    %125 = vector.broadcast %cst_31 : f32 to vector<2x16x16xf32>
    %126 = arith.select %124, %122, %125 : vector<2x16x16xi1>, vector<2x16x16xf32>
    %cst_32 = arith.constant dense<0xFF800000> : vector<2x16xf32>
    %127 = vector.multi_reduction <maximumf>, %126, %cst_32 [2] : vector<2x16x16xf32> to vector<2x16xf32>
    %128 = vector.shape_cast %127 : vector<2x16xf32> to vector<2x16x1xf32>
    %129 = vector.broadcast %128 : vector<2x16x1xf32> to vector<2x16x16xf32>
    %130 = arith.subf %126, %129 : vector<2x16x16xf32>
    %131 = math.exp %130 : vector<2x16x16xf32>
    %cst_33 = arith.constant dense<0.000000e+00> : vector<2x16xf32>
    %132 = vector.multi_reduction <add>, %131, %cst_33 [2] : vector<2x16x16xf32> to vector<2x16xf32>
    %133 = vector.shape_cast %132 : vector<2x16xf32> to vector<2x16x1xf32>
    %134 = tpu.reciprocal %133 {approx = true} : vector<2x16x1xf32> -> vector<2x16x1xf32>
    %135 = vector.broadcast %134 : vector<2x16x1xf32> to vector<2x16x16xf32>
    %136 = arith.mulf %131, %135 : vector<2x16x16xf32>
    %137 = arith.truncf %136 : vector<2x16x16xf32> to vector<2x16x16xbf16>
    "tpu.trace_start"() <{level = 10 : i32, message = "bqk,bkd->bqd"}> : () -> ()
    %cst_34 = arith.constant dense<0.000000e+00> : vector<2x16x32xf32>
    %138 = tpu.matmul %137, %121, %cst_34 {dimension_numbers = #tpu.dot_dimension_numbers<[2], [1], [1], [2], [0, 0, 0, 1, 1, 2], [0], [0]>} : vector<2x16x16xbf16>, vector<2x16x32xbf16>, vector<2x16x32xf32> -> vector<2x16x32xf32>
    "tpu.trace_stop"() : () -> ()
    %139 = vector.shape_cast %138 : vector<2x16x32xf32> to vector<32x32xf32>
    %140 = tpu.concatenate %67, %91, %115, %139 in 1 : vector<32x32xf32>, vector<32x32xf32>, vector<32x32xf32>, vector<32x32xf32> -> vector<32x128xf32>
    %141 = arith.truncf %140 : vector<32x128xf32> to vector<32x128xbf16>
    %c0_35 = arith.constant 0 : index
    %c0_36 = arith.constant 0 : index
    %142 = vector.load %arg6[%c0_35, %c0_36] : memref<128x128xbf16, #tpu.memory_space<vmem>>, vector<128x128xbf16>
    %cst_37 = arith.constant dense<0.000000e+00> : vector<32x128xf32>
    %143 = tpu.matmul %141, %142, %cst_37 {dimension_numbers = #tpu.dot_dimension_numbers<[1], [0], [0], [1], [0, 0, 1, 1], [], []>} : vector<32x128xbf16>, vector<128x128xbf16>, vector<32x128xf32> -> vector<32x128xf32>
    %c0_38 = arith.constant 0 : index
    %c0_39 = arith.constant 0 : index
    %144 = vector.load %arg7[%c0_38, %c0_39] : memref<1x128xf32, #tpu.memory_space<vmem>>, vector<1x128xf32>
    %145 = vector.shape_cast %144 : vector<1x128xf32> to vector<128xf32>
    %146 = vector.shape_cast %145 : vector<128xf32> to vector<1x128xf32>
    %147 = vector.broadcast %146 : vector<1x128xf32> to vector<32x128xf32>
    %148 = arith.addf %143, %147 : vector<32x128xf32>
    %149 = arith.addf %148, %30 : vector<32x128xf32>
    %c0_40 = arith.constant 0 : index
    %c0_41 = arith.constant 0 : index
    %150 = vector.load %arg8[%c0_40, %c0_41] : memref<1x128xf32, #tpu.memory_space<vmem>>, vector<1x128xf32>
    %151 = vector.shape_cast %150 : vector<1x128xf32> to vector<128xf32>
    %c0_42 = arith.constant 0 : index
    %c0_43 = arith.constant 0 : index
    %152 = vector.load %arg9[%c0_42, %c0_43] : memref<1x128xf32, #tpu.memory_space<vmem>>, vector<1x128xf32>
    %153 = vector.shape_cast %152 : vector<1x128xf32> to vector<128xf32>
    %cst_44 = arith.constant dense<0.000000e+00> : vector<32xf32>
    %154 = vector.multi_reduction <add>, %149, %cst_44 [1] : vector<32x128xf32> to vector<32xf32>
    %155 = vector.shape_cast %154 : vector<32xf32> to vector<32x1xf32>
    %cst_45 = arith.constant 1.280000e+02 : f32
    %156 = vector.broadcast %cst_45 : f32 to vector<32x1xf32>
    %157 = arith.divf %155, %156 : vector<32x1xf32>
    %158 = arith.mulf %149, %149 : vector<32x128xf32>
    %cst_46 = arith.constant dense<0.000000e+00> : vector<32xf32>
    %159 = vector.multi_reduction <add>, %158, %cst_46 [1] : vector<32x128xf32> to vector<32xf32>
    %160 = vector.shape_cast %159 : vector<32xf32> to vector<32x1xf32>
    %cst_47 = arith.constant 1.280000e+02 : f32
    %161 = vector.broadcast %cst_47 : f32 to vector<32x1xf32>
    %162 = arith.divf %160, %161 : vector<32x1xf32>
    %163 = arith.mulf %157, %157 : vector<32x1xf32>
    %164 = arith.subf %162, %163 : vector<32x1xf32>
    %cst_48 = arith.constant 0.000000e+00 : f32
    %165 = vector.broadcast %cst_48 : f32 to vector<32x1xf32>
    %166 = arith.maximumf %164, %165 : vector<32x1xf32>
    %167 = vector.broadcast %157 : vector<32x1xf32> to vector<32x128xf32>
    %168 = arith.subf %149, %167 : vector<32x128xf32>
    %cst_49 = arith.constant 9.99999974E-6 : f32
    %169 = vector.broadcast %cst_49 : f32 to vector<32x1xf32>
    %170 = arith.addf %166, %169 : vector<32x1xf32>
    %171 = math.rsqrt %170 : vector<32x1xf32>
    %172 = vector.broadcast %171 : vector<32x1xf32> to vector<32x128xf32>
    %173 = arith.mulf %168, %172 : vector<32x128xf32>
    %174 = vector.shape_cast %151 : vector<128xf32> to vector<1x128xf32>
    %175 = vector.broadcast %174 : vector<1x128xf32> to vector<32x128xf32>
    %176 = arith.mulf %173, %175 : vector<32x128xf32>
    %177 = vector.shape_cast %153 : vector<128xf32> to vector<1x128xf32>
    %178 = vector.broadcast %177 : vector<1x128xf32> to vector<32x128xf32>
    %179 = arith.addf %176, %178 : vector<32x128xf32>
    %180 = arith.truncf %179 : vector<32x128xf32> to vector<32x128xbf16>
    %c0_50 = arith.constant 0 : index
    %c0_51 = arith.constant 0 : index
    %181 = vector.load %arg10[%c0_50, %c0_51] : memref<128x128xbf16, #tpu.memory_space<vmem>>, vector<128x128xbf16>
    %cst_52 = arith.constant dense<0.000000e+00> : vector<32x128xf32>
    %182 = tpu.matmul %180, %181, %cst_52 {dimension_numbers = #tpu.dot_dimension_numbers<[1], [0], [0], [1], [0, 0, 1, 1], [], []>} : vector<32x128xbf16>, vector<128x128xbf16>, vector<32x128xf32> -> vector<32x128xf32>
    %c0_53 = arith.constant 0 : index
    %c0_54 = arith.constant 0 : index
    %183 = vector.load %arg11[%c0_53, %c0_54] : memref<1x128xf32, #tpu.memory_space<vmem>>, vector<1x128xf32>
    %184 = vector.shape_cast %183 : vector<1x128xf32> to vector<128xf32>
    %185 = vector.shape_cast %184 : vector<128xf32> to vector<1x128xf32>
    %186 = vector.broadcast %185 : vector<1x128xf32> to vector<32x128xf32>
    %187 = arith.addf %182, %186 : vector<32x128xf32>
    %cst_55 = arith.constant 0.000000e+00 : f32
    %188 = vector.broadcast %cst_55 : f32 to vector<32x128xf32>
    %189 = arith.maximumf %187, %188 : vector<32x128xf32>
    %190 = arith.truncf %189 : vector<32x128xf32> to vector<32x128xbf16>
    %c0_56 = arith.constant 0 : index
    %c0_57 = arith.constant 0 : index
    %191 = vector.load %arg12[%c0_56, %c0_57] : memref<128x128xbf16, #tpu.memory_space<vmem>>, vector<128x128xbf16>
    %cst_58 = arith.constant dense<0.000000e+00> : vector<32x128xf32>
    %192 = tpu.matmul %190, %191, %cst_58 {dimension_numbers = #tpu.dot_dimension_numbers<[1], [0], [0], [1], [0, 0, 1, 1], [], []>} : vector<32x128xbf16>, vector<128x128xbf16>, vector<32x128xf32> -> vector<32x128xf32>
    %c0_59 = arith.constant 0 : index
    %c0_60 = arith.constant 0 : index
    %193 = vector.load %arg13[%c0_59, %c0_60] : memref<1x128xf32, #tpu.memory_space<vmem>>, vector<1x128xf32>
    %194 = vector.shape_cast %193 : vector<1x128xf32> to vector<128xf32>
    %195 = vector.shape_cast %194 : vector<128xf32> to vector<1x128xf32>
    %196 = vector.broadcast %195 : vector<1x128xf32> to vector<32x128xf32>
    %197 = arith.addf %192, %196 : vector<32x128xf32>
    %198 = arith.addf %197, %179 : vector<32x128xf32>
    %c0_61 = arith.constant 0 : index
    %c0_62 = arith.constant 0 : index
    %199 = vector.load %arg14[%c0_61, %c0_62] : memref<32x128xf32, #tpu.memory_space<vmem>>, vector<32x128xf32>
    tpu.vector_store %arg14[%c0_61, %c0_62], %198 {strides = array<i32>} : memref<32x128xf32, #tpu.memory_space<vmem>>, vector<32x128xf32>,
    return
  }
  func.func @transform_0(%arg0: i32) -> (i32, i32) {
    %c0_i32 = arith.constant 0 : i32
    %c0_i32_0 = arith.constant 0 : i32
    return %arg0, %c0_i32 : i32, i32
  }
  func.func @transform_1(%arg0: i32) -> (i32, i32) {
    %c0_i32 = arith.constant 0 : i32
    %c0_i32_0 = arith.constant 0 : i32
    %c0_i32_1 = arith.constant 0 : i32
    return %c0_i32, %c0_i32_0 : i32, i32
  }
  func.func @transform_2(%arg0: i32) -> (i32, i32) {
    %c0_i32 = arith.constant 0 : i32
    %c0_i32_0 = arith.constant 0 : i32
    %c0_i32_1 = arith.constant 0 : i32
    return %c0_i32, %c0_i32_0 : i32, i32
  }
  func.func @transform_3(%arg0: i32) -> (i32, i32) {
    %c0_i32 = arith.constant 0 : i32
    %c0_i32_0 = arith.constant 0 : i32
    %c0_i32_1 = arith.constant 0 : i32
    return %c0_i32, %c0_i32_0 : i32, i32
  }
  func.func @transform_4(%arg0: i32) -> (i32, i32) {
    %c0_i32 = arith.constant 0 : i32
    %c0_i32_0 = arith.constant 0 : i32
    %c0_i32_1 = arith.constant 0 : i32
    return %c0_i32, %c0_i32_0 : i32, i32
  }
  func.func @transform_5(%arg0: i32) -> (i32, i32) {
    %c0_i32 = arith.constant 0 : i32
    %c0_i32_0 = arith.constant 0 : i32
    %c0_i32_1 = arith.constant 0 : i32
    return %c0_i32, %c0_i32_0 : i32, i32
  }
  func.func @transform_6(%arg0: i32) -> (i32, i32) {
    %c0_i32 = arith.constant 0 : i32
    %c0_i32_0 = arith.constant 0 : i32
    %c0_i32_1 = arith.constant 0 : i32
    return %c0_i32, %c0_i32_0 : i32, i32
  }
  func.func @transform_7(%arg0: i32) -> (i32, i32) {
    %c0_i32 = arith.constant 0 : i32
    %c0_i32_0 = arith.constant 0 : i32
    %c0_i32_1 = arith.constant 0 : i32
    return %c0_i32, %c0_i32_0 : i32, i32
  }
  func.func @transform_8(%arg0: i32) -> (i32, i32) {
    %c0_i32 = arith.constant 0 : i32
    %c0_i32_0 = arith.constant 0 : i32
    %c0_i32_1 = arith.constant 0 : i32
    return %c0_i32, %c0_i32_0 : i32, i32
  }
  func.func @transform_9(%arg0: i32) -> (i32, i32) {
    %c0_i32 = arith.constant 0 : i32
    %c0_i32_0 = arith.constant 0 : i32
    %c0_i32_1 = arith.constant 0 : i32
    return %c0_i32, %c0_i32_0 : i32, i32
  }
  func.func @transform_10(%arg0: i32) -> (i32, i32) {
    %c0_i32 = arith.constant 0 : i32
    %c0_i32_0 = arith.constant 0 : i32
    %c0_i32_1 = arith.constant 0 : i32
    return %c0_i32, %c0_i32_0 : i32, i32
  }
  func.func @transform_11(%arg0: i32) -> (i32, i32) {
    %c0_i32 = arith.constant 0 : i32
    %c0_i32_0 = arith.constant 0 : i32
    %c0_i32_1 = arith.constant 0 : i32
    return %c0_i32, %c0_i32_0 : i32, i32
  }
  func.func @transform_12(%arg0: i32) -> (i32, i32) {
    %c0_i32 = arith.constant 0 : i32
    %c0_i32_0 = arith.constant 0 : i32
    %c0_i32_1 = arith.constant 0 : i32
    return %c0_i32, %c0_i32_0 : i32, i32
  }
  func.func @transform_13(%arg0: i32) -> (i32, i32) {
    %c0_i32 = arith.constant 0 : i32
    %c0_i32_0 = arith.constant 0 : i32
    return %arg0, %c0_i32 : i32, i32
  }
}

</mosaic_0001>

<llo_original>
// kernel: tpu_custom_call.1
$region0: #{tpu_custom_call.1}
  #allocation0 [shape = 'u32[]', space=smem, size = 0x4, offset = 0x4, fixed_abs, tag = 'smem constant byte address 0x4 - core index']
  #allocation1 [shape = 'u32[144,128]{1,0:T(1,128)}', space=vmem, size = 0x12000, scoped, tag = 'internal scratch']
  %s0 = inlined_call_operand.hbm [shape: f32[32,128], index: 0, kind: input, shape index: {}]
  %s1 = inlined_call_operand.hbm [shape: f32[1,128], index: 1, kind: input, shape index: {}]
  %s2 = inlined_call_operand.hbm [shape: f32[1,128], index: 2, kind: input, shape index: {}]
  %s3 = inlined_call_operand.hbm [shape: bf16[128,384], index: 3, kind: input, shape index: {}]
  %s4 = inlined_call_operand.hbm [shape: f32[1,384], index: 4, kind: input, shape index: {}]
  %s5 = inlined_call_operand.hbm [shape: bf16[128,128], index: 5, kind: input, shape index: {}]
  %s6 = inlined_call_operand.hbm [shape: f32[1,128], index: 6, kind: input, shape index: {}]
  %s7 = inlined_call_operand.hbm [shape: f32[1,128], index: 7, kind: input, shape index: {}]
  %s8 = inlined_call_operand.hbm [shape: f32[1,128], index: 8, kind: input, shape index: {}]
  %s9 = inlined_call_operand.hbm [shape: bf16[128,128], index: 9, kind: input, shape index: {}]
  %s10 = inlined_call_operand.hbm [shape: f32[1,128], index: 10, kind: input, shape index: {}]
  %s11 = inlined_call_operand.hbm [shape: bf16[128,128], index: 11, kind: input, shape index: {}]
  %s12 = inlined_call_operand.hbm [shape: f32[1,128], index: 12, kind: input, shape index: {}]
  %s13 = inlined_call_operand.hbm [shape: f32[32,128], index: 13, kind: output, shape index: {}]
  %s14 = sld [smem:[#allocation0]]
  $region114: #{tpu_custom_call.1} parent=0
    _
  %s16 = ssub.s32 1, %s14
  %s17 = scalar_select 0, %s16, %s14
  $region1: #{tpu_custom_call.1} parent=0
    #allocation2 [shape = 'u8[16384]{0}', space=vmem, size = 0x4000, scoped, tag = 'input window, operand 0, single buffered']
    #allocation3 [shape = 's32[1]{0}', space=sflag, size = 0x4, scoped, tag = 'scoped memory for tpu_custom_call.1']
    #allocation4 [shape = 's32[1]{0}', space=sflag, size = 0x4, scoped, tag = 'scoped memory for tpu_custom_call.1']
    #allocation5 [shape = 'u8[512]{0}', space=vmem, size = 0x400, scoped, tag = 'input window, operand 1, single buffered']
    #allocation6 [shape = 's32[1]{0}', space=sflag, size = 0x4, scoped, tag = 'scoped memory for tpu_custom_call.1']
    #allocation7 [shape = 'u8[512]{0}', space=vmem, size = 0x400, scoped, tag = 'input window, operand 2, single buffered']
    #allocation8 [shape = 'u8[98304]{0}', space=vmem, size = 0x18000, scoped, tag = 'input window, operand 3, single buffered']
    #allocation9 [shape = 's32[1]{0}', space=sflag, size = 0x4, scoped, tag = 'scoped memory for tpu_custom_call.1']
    #allocation10 [shape = 'u8[1536]{0}', space=vmem, size = 0x800, scoped, tag = 'input window, operand 4, single buffered']
    #allocation11 [shape = 'u8[32768]{0}', space=vmem, size = 0x8000, scoped, tag = 'input window, operand 5, single buffered']
    #allocation12 [shape = 's32[1]{0}', space=sflag, size = 0x4, scoped, tag = 'scoped memory for tpu_custom_call.1']
    #allocation13 [shape = 'u8[512]{0}', space=vmem, size = 0x400, scoped, tag = 'input window, operand 6, single buffered']
    #allocation14 [shape = 'u8[512]{0}', space=vmem, size = 0x400, scoped, tag = 'input window, operand 7, single buffered']
    #allocation15 [shape = 's32[1]{0}', space=sflag, size = 0x4, scoped, tag = 'scoped memory for tpu_custom_call.1']
    #allocation16 [shape = 'u8[512]{0}', space=vmem, size = 0x400, scoped, tag = 'input window, operand 8, single buffered']
    #allocation17 [shape = 'u8[32768]{0}', space=vmem, size = 0x8000, scoped, tag = 'input window, operand 9, single buffered']
    #allocation18 [shape = 's32[1]{0}', space=sflag, size = 0x4, scoped, tag = 'scoped memory for tpu_custom_call.1']
    #allocation19 [shape = 'u8[512]{0}', space=vmem, size = 0x400, scoped, tag = 'input window, operand 10, single buffered']
    #allocation20 [shape = 'u8[32768]{0}', space=vmem, size = 0x8000, scoped, tag = 'input window, operand 11, single buffered']
    #allocation21 [shape = 's32[1]{0}', space=sflag, size = 0x4, scoped, tag = 'scoped memory for tpu_custom_call.1']
    #allocation22 [shape = 'u8[512]{0}', space=vmem, size = 0x400, scoped, tag = 'input window, operand 12, single buffered']
    #allocation23 [shape = 'u8[16384]{0}', space=vmem, size = 0x4000, scoped, tag = 'output window, operand 0, single buffered']
    %18 = vsyncpa [#allocation3], 0
    %19 = vsyncpa [#allocation6], 0
    %20 = vsyncpa [#allocation9], 0
    %21 = vsyncpa [#allocation12], 0
    %22 = vsyncpa [#allocation15], 0
    %23 = vsyncpa [#allocation18], 0
    %24 = vsyncpa [#allocation21], 0
    %25 = vsyncpa [#allocation4], 0
    // Predicated region
    $region2: #{tpu_custom_call.1} parent=1 // pred_check
      _
    $region3: #{tpu_custom_call.1} parent=1 // pred_check_branch
      %27 = sbr.rel (0) target = $region5
    $region4: #{tpu_custom_call.1} parent=1 // pred_region
      %s29 = ssub.s32 512, 512
      %30 = vsyncadd [#allocation3], %s29
      %s31 = sshll.u32 [#allocation2], 4
      %s32 = int_to_ptr.vmem [resolvable:$true] %s31
      %37 = dma.hbm_to_vmem [thread:$0]  %s0, 512, %s32, [#allocation3], 128, 128, 8
    $region5: #{tpu_custom_call.1} parent=1 // pred_fallthru
      _
    // Predicated region
    $region6: #{tpu_custom_call.1} parent=1 // pred_check
      _
    $region7: #{tpu_custom_call.1} parent=1 // pred_check_branch
      %39 = sbr.rel (0) target = $region9
    $region8: #{tpu_custom_call.1} parent=1 // pred_region
      %s41 = ssub.s32 16, 16
      %42 = vsyncadd [#allocation6], %s41
      %s44 = sshll.u32 [#allocation5], 4
      %s45 = int_to_ptr.vmem [resolvable:$true] %s44
      %47 = dma.hbm_to_vmem [thread:$0]  %s1, 16, %s45, [#allocation6]
    $region9: #{tpu_custom_call.1} parent=1 // pred_fallthru
      _
    // Predicated region
    $region10: #{tpu_custom_call.1} parent=1 // pred_check
      _
    $region11: #{tpu_custom_call.1} parent=1 // pred_check_branch
      %49 = sbr.rel (0) target = $region13
    $region12: #{tpu_custom_call.1} parent=1 // pred_region
      %s51 = ssub.s32 16, 16
      %52 = vsyncadd [#allocation6], %s51
      %s54 = sshll.u32 [#allocation7], 4
      %s55 = int_to_ptr.vmem [resolvable:$true] %s54
      %57 = dma.hbm_to_vmem [thread:$0]  %s2, 16, %s55, [#allocation6]
    $region13: #{tpu_custom_call.1} parent=1 // pred_fallthru
      _
    // Predicated region
    $region14: #{tpu_custom_call.1} parent=1 // pred_check
      _
    $region15: #{tpu_custom_call.1} parent=1 // pred_check_branch
      %59 = sbr.rel (0) target = $region17
    $region16: #{tpu_custom_call.1} parent=1 // pred_region
      %s61 = ssub.s32 3072, 3072
      %62 = vsyncadd [#allocation9], %s61
      %s63 = sshll.u32 [#allocation8], 4
      %s64 = int_to_ptr.vmem [resolvable:$true] %s63
      %69 = dma.hbm_to_vmem [thread:$0]  %s3, 3072, %s64, [#allocation9], 192, 192, 12
    $region17: #{tpu_custom_call.1} parent=1 // pred_fallthru
      _
    // Predicated region
    $region18: #{tpu_custom_call.1} parent=1 // pred_check
      _
    $region19: #{tpu_custom_call.1} parent=1 // pred_check_branch
      %71 = sbr.rel (0) target = $region21
    $region20: #{tpu_custom_call.1} parent=1 // pred_region
      %s73 = ssub.s32 48, 48
      %74 = vsyncadd [#allocation9], %s73
      %s76 = sshll.u32 [#allocation10], 4
      %s77 = int_to_ptr.vmem [resolvable:$true] %s76
      %79 = dma.hbm_to_vmem [thread:$0]  %s4, 48, %s77, [#allocation9]
    $region21: #{tpu_custom_call.1} parent=1 // pred_fallthru
      _
    // Predicated region
    $region22: #{tpu_custom_call.1} parent=1 // pred_check
      _
    $region23: #{tpu_custom_call.1} parent=1 // pred_check_branch
      %81 = sbr.rel (0) target = $region25
    $region24: #{tpu_custom_call.1} parent=1 // pred_region
      %s83 = ssub.s32 1024, 1024
      %84 = vsyncadd [#allocation12], %s83
      %s85 = sshll.u32 [#allocation11], 4
      %s86 = int_to_ptr.vmem [resolvable:$true] %s85
      %91 = dma.hbm_to_vmem [thread:$0]  %s5, 1024, %s86, [#allocation12], 64, 64, 4
    $region25: #{tpu_custom_call.1} parent=1 // pred_fallthru
      _
    // Predicated region
    $region26: #{tpu_custom_call.1} parent=1 // pred_check
      _
    $region27: #{tpu_custom_call.1} parent=1 // pred_check_branch
      %93 = sbr.rel (0) target = $region29
    $region28: #{tpu_custom_call.1} parent=1 // pred_region
      %s95 = ssub.s32 16, 16
      %96 = vsyncadd [#allocation12], %s95
      %s98 = sshll.u32 [#allocation13], 4
      %s99 = int_to_ptr.vmem [resolvable:$true] %s98
      %101 = dma.hbm_to_vmem [thread:$0]  %s6, 16, %s99, [#allocation12]
    $region29: #{tpu_custom_call.1} parent=1 // pred_fallthru
      _
    // Predicated region
    $region30: #{tpu_custom_call.1} parent=1 // pred_check
      _
    $region31: #{tpu_custom_call.1} parent=1 // pred_check_branch
      %103 = sbr.rel (0) target = $region33
    $region32: #{tpu_custom_call.1} parent=1 // pred_region
      %s105 = ssub.s32 16, 16
      %106 = vsyncadd [#allocation15], %s105
      %s108 = sshll.u32 [#allocation14], 4
      %s109 = int_to_ptr.vmem [resolvable:$true] %s108
      %111 = dma.hbm_to_vmem [thread:$0]  %s7, 16, %s109, [#allocation15]
    $region33: #{tpu_custom_call.1} parent=1 // pred_fallthru
      _
    // Predicated region
    $region34: #{tpu_custom_call.1} parent=1 // pred_check
      _
    $region35: #{tpu_custom_call.1} parent=1 // pred_check_branch
      %113 = sbr.rel (0) target = $region37
    $region36: #{tpu_custom_call.1} parent=1 // pred_region
      %s115 = ssub.s32 16, 16
      %116 = vsyncadd [#allocation15], %s115
      %s118 = sshll.u32 [#allocation16], 4
      %s119 = int_to_ptr.vmem [resolvable:$true] %s118
      %121 = dma.hbm_to_vmem [thread:$0]  %s8, 16, %s119, [#allocation15]
    $region37: #{tpu_custom_call.1} parent=1 // pred_fallthru
      _
    // Predicated region
    $region38: #{tpu_custom_call.1} parent=1 // pred_check
      _
    $region39: #{tpu_custom_call.1} parent=1 // pred_check_branch
      %123 = sbr.rel (0) target = $region41
    $region40: #{tpu_custom_call.1} parent=1 // pred_region
      %s125 = ssub.s32 1024, 1024
      %126 = vsyncadd [#allocation18], %s125
      %s127 = sshll.u32 [#allocation17], 4
      %s128 = int_to_ptr.vmem [resolvable:$true] %s127
      %133 = dma.hbm_to_vmem [thread:$0]  %s9, 1024, %s128, [#allocation18], 64, 64, 4
    $region41: #{tpu_custom_call.1} parent=1 // pred_fallthru
      _
    // Predicated region
    $region42: #{tpu_custom_call.1} parent=1 // pred_check
      _
    $region43: #{tpu_custom_call.1} parent=1 // pred_check_branch
      %135 = sbr.rel (0) target = $region45
    $region44: #{tpu_custom_call.1} parent=1 // pred_region
      %s137 = ssub.s32 16, 16
      %138 = vsyncadd [#allocation18], %s137
      %s140 = sshll.u32 [#allocation19], 4
      %s141 = int_to_ptr.vmem [resolvable:$true] %s140
      %143 = dma.hbm_to_vmem [thread:$0]  %s10, 16, %s141, [#allocation18]
    $region45: #{tpu_custom_call.1} parent=1 // pred_fallthru
      _
    // Predicated region
    $region46: #{tpu_custom_call.1} parent=1 // pred_check
      _
    $region47: #{tpu_custom_call.1} parent=1 // pred_check_branch
      %145 = sbr.rel (0) target = $region49
    $region48: #{tpu_custom_call.1} parent=1 // pred_region
      %s147 = ssub.s32 1024, 1024
      %148 = vsyncadd [#allocation21], %s147
      %s149 = sshll.u32 [#allocation20], 4
      %s150 = int_to_ptr.vmem [resolvable:$true] %s149
      %155 = dma.hbm_to_vmem [thread:$0]  %s11, 1024, %s150, [#allocation21], 64, 64, 4
    $region49: #{tpu_custom_call.1} parent=1 // pred_fallthru
      _
    // Predicated region
    $region50: #{tpu_custom_call.1} parent=1 // pred_check
      _
    $region51: #{tpu_custom_call.1} parent=1 // pred_check_branch
      %157 = sbr.rel (0) target = $region53
    $region52: #{tpu_custom_call.1} parent=1 // pred_region
      %s159 = ssub.s32 16, 16
      %160 = vsyncadd [#allocation21], %s159
      %s162 = sshll.u32 [#allocation22], 4
      %s163 = int_to_ptr.vmem [resolvable:$true] %s162
      %165 = dma.hbm_to_vmem [thread:$0]  %s12, 16, %s163, [#allocation21]
    $region53: #{tpu_custom_call.1} parent=1 // pred_fallthru
      _
    // Predicated region
    $region54: #{tpu_custom_call.1} parent=1 // pred_check
      _
    $region55: #{tpu_custom_call.1} parent=1 // pred_check_branch
      %167 = sbr.rel (0) target = $region57
    $region56: #{tpu_custom_call.1} parent=1 // pred_region
      %168 = dma.done [#allocation3], 512
    $region57: #{tpu_custom_call.1} parent=1 // pred_fallthru
      _
    // Predicated region
    $region58: #{tpu_custom_call.1} parent=1 // pred_check
      _
    $region59: #{tpu_custom_call.1} parent=1 // pred_check_branch
      %170 = sbr.rel (0) target = $region61
    $region60: #{tpu_custom_call.1} parent=1 // pred_region
      %171 = dma.done [#allocation6], 16
    $region61: #{tpu_custom_call.1} parent=1 // pred_fallthru
      _
    // Predicated region
    $region62: #{tpu_custom_call.1} parent=1 // pred_check
      _
    $region63: #{tpu_custom_call.1} parent=1 // pred_check_branch
      %173 = sbr.rel (0) target = $region65
    $region64: #{tpu_custom_call.1} parent=1 // pred_region
      %174 = dma.done [#allocation6], 16
    $region65: #{tpu_custom_call.1} parent=1 // pred_fallthru
      _
    // Predicated region
    $region66: #{tpu_custom_call.1} parent=1 // pred_check
      _
    $region67: #{tpu_custom_call.1} parent=1 // pred_check_branch
      %176 = sbr.rel (0) target = $region69
    $region68: #{tpu_custom_call.1} parent=1 // pred_region
      %177 = dma.done [#allocation9], 3072
    $region69: #{tpu_custom_call.1} parent=1 // pred_fallthru
      _
    // Predicated region
    $region70: #{tpu_custom_call.1} parent=1 // pred_check
      _
    $region71: #{tpu_custom_call.1} parent=1 // pred_check_branch
      %179 = sbr.rel (0) target = $region73
    $region72: #{tpu_custom_call.1} parent=1 // pred_region
      %180 = dma.done [#allocation9], 48
    $region73: #{tpu_custom_call.1} parent=1 // pred_fallthru
      _
    // Predicated region
    $region74: #{tpu_custom_call.1} parent=1 // pred_check
      _
    $region75: #{tpu_custom_call.1} parent=1 // pred_check_branch
      %182 = sbr.rel (0) target = $region77
    $region76: #{tpu_custom_call.1} parent=1 // pred_region
      %183 = dma.done [#allocation12], 1024
    $region77: #{tpu_custom_call.1} parent=1 // pred_fallthru
      _
    // Predicated region
    $region78: #{tpu_custom_call.1} parent=1 // pred_check
      _
    $region79: #{tpu_custom_call.1} parent=1 // pred_check_branch
      %185 = sbr.rel (0) target = $region81
    $region80: #{tpu_custom_call.1} parent=1 // pred_region
      %186 = dma.done [#allocation12], 16
    $region81: #{tpu_custom_call.1} parent=1 // pred_fallthru
      _
    // Predicated region
    $region82: #{tpu_custom_call.1} parent=1 // pred_check
      _
    $region83: #{tpu_custom_call.1} parent=1 // pred_check_branch
      %188 = sbr.rel (0) target = $region85
    $region84: #{tpu_custom_call.1} parent=1 // pred_region
      %189 = dma.done [#allocation15], 16
    $region85: #{tpu_custom_call.1} parent=1 // pred_fallthru
      _
    // Predicated region
    $region86: #{tpu_custom_call.1} parent=1 // pred_check
      _
    $region87: #{tpu_custom_call.1} parent=1 // pred_check_branch
      %191 = sbr.rel (0) target = $region89
    $region88: #{tpu_custom_call.1} parent=1 // pred_region
      %192 = dma.done [#allocation15], 16
    $region89: #{tpu_custom_call.1} parent=1 // pred_fallthru
      _
    // Predicated region
    $region90: #{tpu_custom_call.1} parent=1 // pred_check
      _
    $region91: #{tpu_custom_call.1} parent=1 // pred_check_branch
      %194 = sbr.rel (0) target = $region93
    $region92: #{tpu_custom_call.1} parent=1 // pred_region
      %195 = dma.done [#allocation18], 1024
    $region93: #{tpu_custom_call.1} parent=1 // pred_fallthru
      _
    // Predicated region
    $region94: #{tpu_custom_call.1} parent=1 // pred_check
      _
    $region95: #{tpu_custom_call.1} parent=1 // pred_check_branch
      %197 = sbr.rel (0) target = $region97
    $region96: #{tpu_custom_call.1} parent=1 // pred_region
      %198 = dma.done [#allocation18], 16
    $region97: #{tpu_custom_call.1} parent=1 // pred_fallthru
      _
    // Predicated region
    $region98: #{tpu_custom_call.1} parent=1 // pred_check
      _
    $region99: #{tpu_custom_call.1} parent=1 // pred_check_branch
      %200 = sbr.rel (0) target = $region101
    $region100: #{tpu_custom_call.1} parent=1 // pred_region
      %201 = dma.done [#allocation21], 1024
    $region101: #{tpu_custom_call.1} parent=1 // pred_fallthru
      _
    // Predicated region
    $region102: #{tpu_custom_call.1} parent=1 // pred_check
      _
    $region103: #{tpu_custom_call.1} parent=1 // pred_check_branch
      %203 = sbr.rel (0) target = $region105
    $region104: #{tpu_custom_call.1} parent=1 // pred_region
      %204 = dma.done [#allocation21], 16
    $region105: #{tpu_custom_call.1} parent=1 // pred_fallthru
      _
    %v206 = vld [vmem:[#allocation2] sm:$0xff]
    %v207 = vld [vmem:[#allocation2 + $0x8] sm:$0xff]
    %v208 = vld [vmem:[#allocation2 + $0x10] sm:$0xff]
    %v209 = vld [vmem:[#allocation2 + $0x18] sm:$0xff]
    %v210 = vld [vmem:[#allocation5] sm:$0x1]
    %v211 = vld [vmem:[#allocation7] sm:$0x1]
    %212 = vadd.xlane.f32.xlu0 %v206
    %v213 = vpop.xlane.xlu0 %212
    %214 = vadd.xlane.f32.xlu0 %v207
    %v215 = vpop.xlane.xlu0 %214
    %216 = vadd.xlane.f32.xlu0 %v208
    %v217 = vpop.xlane.xlu0 %216
    %218 = vadd.xlane.f32.xlu0 %v209
    %v219 = vpop.xlane.xlu0 %218
    %v220 = vrcp.pop 128.0
    %v221 = vmul.f32 %v213, %v220
    %v222 = vmul.f32 %v215, %v220
    %v223 = vmul.f32 %v217, %v220
    %v224 = vmul.f32 %v219, %v220
    %v225 = vmul.f32 %v206, %v206
    %v226 = vmul.f32 %v207, %v207
    %v227 = vmul.f32 %v208, %v208
    %v228 = vmul.f32 %v209, %v209
    %229 = vadd.xlane.f32.xlu0 %v225
    %v230 = vpop.xlane.xlu0 %229
    %231 = vadd.xlane.f32.xlu0 %v226
    %v232 = vpop.xlane.xlu0 %231
    %233 = vadd.xlane.f32.xlu0 %v227
    %v234 = vpop.xlane.xlu0 %233
    %235 = vadd.xlane.f32.xlu0 %v228
    %v236 = vpop.xlane.xlu0 %235
    %v237 = vmul.f32 %v230, %v220
    %v238 = vmul.f32 %v232, %v220
    %v239 = vmul.f32 %v234, %v220
    %v240 = vmul.f32 %v236, %v220
    %v241 = vmul.f32 %v221, %v221
    %v242 = vmul.f32 %v222, %v222
    %v243 = vmul.f32 %v223, %v223
    %v244 = vmul.f32 %v224, %v224
    %v245 = vsub.f32 %v237, %v241
    %v246 = vsub.f32 %v238, %v242
    %v247 = vsub.f32 %v239, %v243
    %v248 = vsub.f32 %v240, %v244
    %v249 = vmax.f32 %v245, 0.0
    %v250 = vmax.f32 %v246, 0.0
    %v251 = vmax.f32 %v247, 0.0
    %v252 = vmax.f32 %v248, 0.0
    %v253 = vsub.f32 %v206, %v221
    %v254 = vsub.f32 %v207, %v222
    %v255 = vsub.f32 %v208, %v223
    %v256 = vsub.f32 %v209, %v224
    %v257 = vadd.f32 %v249, 1e-05
    %v258 = vadd.f32 %v250, 1e-05
    %v259 = vadd.f32 %v251, 1e-05
    %v260 = vadd.f32 %v252, 1e-05
    %v261 = vrsqrt.pop %v257
    %v262 = vrsqrt.pop %v258
    %v263 = vrsqrt.pop %v259
    %v264 = vrsqrt.pop %v260
    %v265 = vmul.f32 %v253, %v261
    %v266 = vmul.f32 %v254, %v262
    %v267 = vmul.f32 %v255, %v263
    %v268 = vmul.f32 %v256, %v264
    %v270 = vlaneseq
    %v271 = vshrl.u32 %v270, 7
    %v272 = vsub.s32 0, %v271
    %v273 = vrot.slane %v210, %v272
    %v275 = vmul.f32 %v265, %v273
    %v276 = vmul.f32 %v266, %v273
    %v277 = vmul.f32 %v267, %v273
    %v278 = vmul.f32 %v268, %v273
    %v280 = vlaneseq
    %v281 = vshrl.u32 %v280, 7
    %v282 = vsub.s32 0, %v281
    %v283 = vrot.slane %v211, %v282
    %v285 = vadd.f32 %v275, %v283
    %v286 = vadd.f32 %v276, %v283
    %v287 = vadd.f32 %v277, %v283
    %v288 = vadd.f32 %v278, %v283
    %v289 = vpack.c.bf16 %v286, %v285
    %v290 = vpack.c.bf16 %v288, %v287
    %v291 = vld [vmem:[#allocation8] sm:$0xff]
    %v292 = vld [vmem:[#allocation8 + $0x8] sm:$0xf]
    %v293 = vld [vmem:[#allocation8 + $0xc] sm:$0xff]
    %v294 = vld [vmem:[#allocation8 + $0x14] sm:$0xf]
    %v295 = vld [vmem:[#allocation8 + $0x18] sm:$0xff]
    %v296 = vld [vmem:[#allocation8 + $0x20] sm:$0xf]
    %v297 = vld [vmem:[#allocation8 + $0x24] sm:$0xff]
    %v298 = vld [vmem:[#allocation8 + $0x2c] sm:$0xf]
    %v299 = vld [vmem:[#allocation8 + $0x30] sm:$0xff]
    %v300 = vld [vmem:[#allocation8 + $0x38] sm:$0xf]
    %v301 = vld [vmem:[#allocation8 + $0x3c] sm:$0xff]
    %v302 = vld [vmem:[#allocation8 + $0x44] sm:$0xf]
    %v303 = vld [vmem:[#allocation8 + $0x48] sm:$0xff]
    %v304 = vld [vmem:[#allocation8 + $0x50] sm:$0xf]
    %v305 = vld [vmem:[#allocation8 + $0x54] sm:$0xff]
    %v306 = vld [vmem:[#allocation8 + $0x5c] sm:$0xf]
    %v307 = vld [vmem:[#allocation8 + $0x60] sm:$0xff]
    %v308 = vld [vmem:[#allocation8 + $0x68] sm:$0xf]
    %v309 = vld [vmem:[#allocation8 + $0x6c] sm:$0xff]
    %v310 = vld [vmem:[#allocation8 + $0x74] sm:$0xf]
    %v311 = vld [vmem:[#allocation8 + $0x78] sm:$0xff]
    %v312 = vld [vmem:[#allocation8 + $0x80] sm:$0xf]
    %v313 = vld [vmem:[#allocation8 + $0x84] sm:$0xff]
    %v314 = vld [vmem:[#allocation8 + $0x8c] sm:$0xf]
    %v315 = vld [vmem:[#allocation8 + $0x90] sm:$0xff]
    %v316 = vld [vmem:[#allocation8 + $0x98] sm:$0xf]
    %v317 = vld [vmem:[#allocation8 + $0x9c] sm:$0xff]
    %v318 = vld [vmem:[#allocation8 + $0xa4] sm:$0xf]
    %v319 = vld [vmem:[#allocation8 + $0xa8] sm:$0xff]
    %v320 = vld [vmem:[#allocation8 + $0xb0] sm:$0xf]
    %v321 = vld [vmem:[#allocation8 + $0xb4] sm:$0xff]
    %v322 = vld [vmem:[#allocation8 + $0xbc] sm:$0xf]
    %v323 = vld [vmem:[#allocation10] sm:$0x7]
    %v325 = vlaneseq
    %v326 = vshrl.u32 %v325, 7
    %v327 = vsub.s32 0, %v326
    %v328 = vrot.slane %v323, %v327
    %v329 = vlaneseq
    %v330 = vshrl.u32 %v329, 7
    %v331 = vsub.s32 1, %v330
    %v332 = vrot.slane %v323, %v331
    %v333 = vlaneseq
    %v334 = vshrl.u32 %v333, 7
    %v335 = vsub.s32 2, %v334
    %v336 = vrot.slane %v323, %v335
    %v372 = vunpack.c.l.b16 %v291
    %v373 = vunpack.c.h.b16 %v291
    %v374 = vunpack.c.l.b16 %v292
    %v375 = vunpack.c.l.b16 %v293
    %v376 = vunpack.c.h.b16 %v293
    %v377 = vunpack.c.l.b16 %v294
    %v378 = vunpack.c.l.b16 %v295
    %v379 = vunpack.c.h.b16 %v295
    %v380 = vunpack.c.l.b16 %v296
    %v381 = vunpack.c.l.b16 %v297
    %v382 = vunpack.c.h.b16 %v297
    %v383 = vunpack.c.l.b16 %v298
    %v384 = vunpack.c.l.b16 %v299
    %v385 = vunpack.c.h.b16 %v299
    %v386 = vunpack.c.l.b16 %v300
    %v387 = vunpack.c.l.b16 %v301
    %v388 = vunpack.c.h.b16 %v301
    %v389 = vunpack.c.l.b16 %v302
    %v390 = vunpack.c.l.b16 %v303
    %v391 = vunpack.c.h.b16 %v303
    %v392 = vunpack.c.l.b16 %v304
    %v393 = vunpack.c.l.b16 %v305
    %v394 = vunpack.c.h.b16 %v305
    %v395 = vunpack.c.l.b16 %v306
    %v396 = vunpack.c.l.b16 %v307
    %v397 = vunpack.c.h.b16 %v307
    %v398 = vunpack.c.l.b16 %v308
    %v399 = vunpack.c.l.b16 %v309
    %v400 = vunpack.c.h.b16 %v309
    %v401 = vunpack.c.l.b16 %v310
    %v402 = vunpack.c.l.b16 %v311
    %v403 = vunpack.c.h.b16 %v311
    %v404 = vunpack.c.l.b16 %v312
    %v405 = vunpack.c.l.b16 %v313
    %v406 = vunpack.c.h.b16 %v313
    %v407 = vunpack.c.l.b16 %v314
    %v408 = vunpack.c.l.b16 %v315
    %v409 = vunpack.c.h.b16 %v315
    %v410 = vunpack.c.l.b16 %v316
    %v411 = vunpack.c.l.b16 %v317
    %v412 = vunpack.c.h.b16 %v317
    %v413 = vunpack.c.l.b16 %v318
    %v414 = vunpack.c.l.b16 %v319
    %v415 = vunpack.c.h.b16 %v319
    %v416 = vunpack.c.l.b16 %v320
    %v417 = vunpack.c.l.b16 %v321
    %v418 = vunpack.c.h.b16 %v321
    %v419 = vunpack.c.l.b16 %v322
    %v420 = vpack.c.b16 %v375, %v372
    %v421 = vpack.c.b16 %v376, %v373
    %v422 = vpack.c.b16 %v377, %v374
    %v423 = vpack.c.b16 %v381, %v378
    %v424 = vpack.c.b16 %v382, %v379
    %v425 = vpack.c.b16 %v383, %v380
    %v426 = vpack.c.b16 %v387, %v384
    %v427 = vpack.c.b16 %v388, %v385
    %v428 = vpack.c.b16 %v389, %v386
    %v429 = vpack.c.b16 %v393, %v390
    %v430 = vpack.c.b16 %v394, %v391
    %v431 = vpack.c.b16 %v395, %v392
    %v432 = vpack.c.b16 %v399, %v396
    %v433 = vpack.c.b16 %v400, %v397
    %v434 = vpack.c.b16 %v401, %v398
    %v435 = vpack.c.b16 %v405, %v402
    %v436 = vpack.c.b16 %v406, %v403
    %v437 = vpack.c.b16 %v407, %v404
    %v438 = vpack.c.b16 %v411, %v408
    %v439 = vpack.c.b16 %v412, %v409
    %v440 = vpack.c.b16 %v413, %v410
    %v441 = vpack.c.b16 %v417, %v414
    %v442 = vpack.c.b16 %v418, %v415
    %v443 = vpack.c.b16 %v419, %v416
    %468 = vmatprep.subr.bf16.mxu0 %v421
    %469 = vmatpush1.bf16.msra.mxu0 %v420
    %470 = vmatprep.subr.bf16.mxu0 %v424
    %471 = vmatpush1.bf16.msra.mxu0 %v423
    %472 = vmatprep.subr.bf16.mxu0 %v427
    %473 = vmatpush1.bf16.msra.mxu0 %v426
    %474 = vmatprep.subr.bf16.mxu0 %v430
    %475 = vmatpush1.bf16.msra.mxu0 %v429
    %476 = vmatprep.subr.bf16.mxu0 %v433
    %477 = vmatpush1.bf16.msra.mxu0 %v432
    %478 = vmatprep.subr.bf16.mxu0 %v436
    %479 = vmatpush1.bf16.msra.mxu0 %v435
    %480 = vmatprep.subr.bf16.mxu0 %v439
    %481 = vmatpush1.bf16.msra.mxu0 %v438
    %482 = vmatprep.subr.bf16.mxu0 %v442
    %483 = vmatpush1.bf16.msra.mxu0 %v441
    %484 = vmatprep.subr.bf16.mxu0 0
    %485 = vmatpush1.bf16.msra.mxu0 0
    %486 = vmatprep.subr.bf16.mxu0 0
    %487 = vmatpush1.bf16.msra.mxu0 0
    %488 = vmatprep.subr.bf16.mxu0 0
    %489 = vmatpush1.bf16.msra.mxu0 0
    %490 = vmatprep.subr.bf16.mxu0 0
    %491 = vmatpush1.bf16.msra.mxu0 0
    %492 = vmatprep.subr.bf16.mxu0 0
    %493 = vmatpush1.bf16.msra.mxu0 0
    %494 = vmatprep.subr.bf16.mxu0 0
    %495 = vmatpush1.bf16.msra.mxu0 0
    %496 = vmatprep.subr.bf16.mxu0 0
    %497 = vmatpush1.bf16.msra.mxu0 0
    %498 = vmatprep.subr.bf16.mxu0 0
    %499 = vmatpush1.bf16.msra.mxu0 0
    %500 = vmatprep.mubr.bf16.mxu0 0
    %501 = vmatmul.mubr.bf16.gmra.mrb[0].mxu0 %v289
    %v502 = vpop.f32.mrb[0].mxu0
    %v503 = vadd.f32 %v328, %v502
    %v504 = vpop.f32.mrb[0].mxu0
    %v505 = vadd.f32 %v332, %v504
    %v506 = vpop.f32.mrb[0].mxu0
    %v507 = vadd.f32 %v328, %v506
    %v508 = vpop.f32.mrb[0].mxu0
    %v509 = vadd.f32 %v332, %v508
    %510 = vmatprep.mubr.bf16.mxu0 0
    %511 = vmatmul.mubr.bf16.gmra.mrb[0].mxu0 %v290
    %v512 = vpop.f32.mrb[0].mxu0
    %v513 = vadd.f32 %v328, %v512
    %v514 = vpop.f32.mrb[0].mxu0
    %v515 = vadd.f32 %v332, %v514
    %v516 = vpop.f32.mrb[0].mxu0
    %v517 = vadd.f32 %v328, %v516
    %v518 = vpop.f32.mrb[0].mxu0
    %v519 = vadd.f32 %v332, %v518
    %520 = vdwg.mxu0
    %521 = vmatprep.subr.bf16.mxu0 0
    %522 = vmatpush1.bf16.msra.mxu0 %v422
    %523 = vmatprep.subr.bf16.mxu0 0
    %524 = vmatpush1.bf16.msra.mxu0 %v425
    %525 = vmatprep.subr.bf16.mxu0 0
    %526 = vmatpush1.bf16.msra.mxu0 %v428
    %527 = vmatprep.subr.bf16.mxu0 0
    %528 = vmatpush1.bf16.msra.mxu0 %v431
    %529 = vmatprep.subr.bf16.mxu0 0
    %530 = vmatpush1.bf16.msra.mxu0 %v434
    %531 = vmatprep.subr.bf16.mxu0 0
    %532 = vmatpush1.bf16.msra.mxu0 %v437
    %533 = vmatprep.subr.bf16.mxu0 0
    %534 = vmatpush1.bf16.msra.mxu0 %v440
    %535 = vmatprep.subr.bf16.mxu0 0
    %536 = vmatpush1.bf16.msra.mxu0 %v443
    %537 = vmatprep.subr.bf16.mxu0 0
    %538 = vmatpush1.bf16.msra.mxu0 0
    %539 = vmatprep.subr.bf16.mxu0 0
    %540 = vmatpush1.bf16.msra.mxu0 0
    %541 = vmatprep.subr.bf16.mxu0 0
    %542 = vmatpush1.bf16.msra.mxu0 0
    %543 = vmatprep.subr.bf16.mxu0 0
    %544 = vmatpush1.bf16.msra.mxu0 0
    %545 = vmatprep.subr.bf16.mxu0 0
    %546 = vmatpush1.bf16.msra.mxu0 0
    %547 = vmatprep.subr.bf16.mxu0 0
    %548 = vmatpush1.bf16.msra.mxu0 0
    %549 = vmatprep.subr.bf16.mxu0 0
    %550 = vmatpush1.bf16.msra.mxu0 0
    %551 = vmatprep.subr.bf16.mxu0 0
    %552 = vmatpush1.bf16.msra.mxu0 0
    %553 = vmatprep.mubr.bf16.mxu0 0
    %554 = vmatmul.mubr.bf16.gmra.mrb[0].mxu0 %v289
    %v555 = vpop.f32.mrb[0].mxu0
    %v556 = vadd.f32 %v336, %v555
    %v557 = vpop.f32.mrb[0].mxu0
    %v558 = vpop.f32.mrb[0].mxu0
    %v559 = vadd.f32 %v336, %v558
    %v560 = vpop.f32.mrb[0].mxu0
    %561 = vmatprep.mubr.bf16.mxu0 0
    %562 = vmatmul.mubr.bf16.gmra.mrb[0].mxu0 %v290
    %v563 = vpop.f32.mrb[0].mxu0
    %v564 = vadd.f32 %v336, %v563
    %v565 = vpop.f32.mrb[0].mxu0
    %v566 = vpop.f32.mrb[0].mxu0
    %v567 = vadd.f32 %v336, %v566
    %v568 = vpop.f32.mrb[0].mxu0
    %569 = vdwg.mxu0
    %v570 = vpack.c.bf16 %v507, %v503
    %v571 = vpack.c.bf16 %v509, %v505
    %v572 = vpack.c.bf16 %v559, %v556
    %v573 = vpack.c.bf16 %v517, %v513
    %v574 = vpack.c.bf16 %v519, %v515
    %v575 = vpack.c.bf16 %v567, %v564
    %v576 = vlaneseq
    %v577 = vshrl.u32 %v576, 7
    %v578 = vadd.s32 %v577, 8
    %v579 = vlaneseq
    %v580 = vand.u32 %v579, 127
    %vm581 = vcmp.ge.s32.totalorder %v577, %v580
    %vm582 = vcmp.ge.s32.totalorder %v578, %v580
    %vm583 = vcmask 261120
    %v585 = vsel %vm583, %v570, 0
    %v588 = vsel %vm583, %v571, 0
    %590 = vmatprep.subr.bf16.mxu0 0
    %591 = vmatpush1.bf16.xpose.msra.mxu0 %v588
    %592 = vmatprep.subr.bf16.mxu0 0
    %593 = vmatpush1.bf16.xpose.msra.mxu0 0
    %594 = vmatprep.subr.bf16.mxu0 0
    %595 = vmatpush1.bf16.xpose.msra.mxu0 0
    %596 = vmatprep.subr.bf16.mxu0 0
    %597 = vmatpush1.bf16.xpose.msra.mxu0 0
    %598 = vmatprep.subr.bf16.mxu0 0
    %599 = vmatpush1.bf16.xpose.msra.mxu0 0
    %600 = vmatprep.subr.bf16.mxu0 0
    %601 = vmatpush1.bf16.xpose.msra.mxu0 0
    %602 = vmatprep.subr.bf16.mxu0 0
    %603 = vmatpush1.bf16.xpose.msra.mxu0 0
    %604 = vmatprep.subr.bf16.mxu0 0
    %605 = vmatpush1.bf16.xpose.msra.mxu0 0
    %606 = vmatprep.subr.bf16.mxu0 0
    %607 = vmatpush1.bf16.xpose.msra.mxu0 0
    %608 = vmatprep.subr.bf16.mxu0 0
    %609 = vmatpush1.bf16.xpose.msra.mxu0 0
    %610 = vmatprep.subr.bf16.mxu0 0
    %611 = vmatpush1.bf16.xpose.msra.mxu0 0
    %612 = vmatprep.subr.bf16.mxu0 0
    %613 = vmatpush1.bf16.xpose.msra.mxu0 0
    %614 = vmatprep.subr.bf16.mxu0 0
    %615 = vmatpush1.bf16.xpose.msra.mxu0 0
    %616 = vmatprep.subr.bf16.mxu0 0
    %617 = vmatpush1.bf16.xpose.msra.mxu0 0
    %618 = vmatprep.subr.bf16.mxu0 0
    %619 = vmatpush1.bf16.xpose.msra.mxu0 0
    %620 = vmatprep.subr.bf16.mxu0 0
    %621 = vmatpush1.bf16.xpose.msra.mxu0 0
    %622 = vmatprep.mubr.bf16.mxu0 0
    %623 = vmatmul.mubr.bf16.gmra.mrb[0].mxu0 %v585
    %v624 = vpop.f32.mrb[0].mxu0
    %v625 = vadd.f32 0.0, %v624
    %v626 = vpop.f32.mrb[0].mxu0
    %v627 = vpop.f32.mrb[0].mxu0
    %v628 = vadd.f32 0.0, %v627
    %v629 = vpop.f32.mrb[0].mxu0
    %630 = vdwg.mxu0
    %v632 = vsel %vm583, %v573, 0
    %v635 = vsel %vm583, %v574, 0
    %637 = vmatprep.subr.bf16.mxu0 0
    %638 = vmatpush1.bf16.xpose.msra.mxu0 %v635
    %639 = vmatprep.subr.bf16.mxu0 0
    %640 = vmatpush1.bf16.xpose.msra.mxu0 0
    %641 = vmatprep.subr.bf16.mxu0 0
    %642 = vmatpush1.bf16.xpose.msra.mxu0 0
    %643 = vmatprep.subr.bf16.mxu0 0
    %644 = vmatpush1.bf16.xpose.msra.mxu0 0
    %645 = vmatprep.subr.bf16.mxu0 0
    %646 = vmatpush1.bf16.xpose.msra.mxu0 0
    %647 = vmatprep.subr.bf16.mxu0 0
    %648 = vmatpush1.bf16.xpose.msra.mxu0 0
    %649 = vmatprep.subr.bf16.mxu0 0
    %650 = vmatpush1.bf16.xpose.msra.mxu0 0
    %651 = vmatprep.subr.bf16.mxu0 0
    %652 = vmatpush1.bf16.xpose.msra.mxu0 0
    %653 = vmatprep.subr.bf16.mxu0 0
    %654 = vmatpush1.bf16.xpose.msra.mxu0 0
    %655 = vmatprep.subr.bf16.mxu0 0
    %656 = vmatpush1.bf16.xpose.msra.mxu0 0
    %657 = vmatprep.subr.bf16.mxu0 0
    %658 = vmatpush1.bf16.xpose.msra.mxu0 0
    %659 = vmatprep.subr.bf16.mxu0 0
    %660 = vmatpush1.bf16.xpose.msra.mxu0 0
    %661 = vmatprep.subr.bf16.mxu0 0
    %662 = vmatpush1.bf16.xpose.msra.mxu0 0
    %663 = vmatprep.subr.bf16.mxu0 0
    %664 = vmatpush1.bf16.xpose.msra.mxu0 0
    %665 = vmatprep.subr.bf16.mxu0 0
    %666 = vmatpush1.bf16.xpose.msra.mxu0 0
    %667 = vmatprep.subr.bf16.mxu0 0
    %668 = vmatpush1.bf16.xpose.msra.mxu0 0
    %669 = vmatprep.mubr.bf16.mxu0 0
    %670 = vmatmul.mubr.bf16.gmra.mrb[0].mxu0 %v632
    %v671 = vpop.f32.mrb[0].mxu0
    %v672 = vadd.f32 0.0, %v671
    %v673 = vpop.f32.mrb[0].mxu0
    %v674 = vpop.f32.mrb[0].mxu0
    %v675 = vadd.f32 0.0, %v674
    %v676 = vpop.f32.mrb[0].mxu0
    %677 = vdwg.mxu0
    %v678 = vsel %vm581, 1, 0
    %v679 = vsel %vm582, 1, 0
    %vm680 = vcmp.eq.s32.totalorder %v678, 1
    %vm681 = vcmp.eq.s32.totalorder %v679, 1
    %v682 = vsel %vm680, %v625, -1e+30
    %v683 = vsel %vm681, %v628, -1e+30
    %v684 = vsel %vm680, %v672, -1e+30
    %v685 = vsel %vm681, %v675, -1e+30
    %vm686 = vcmask 130048
    %v687 = vsel %vm686, %v682, -inf
    %688 = vmax.xlane.f32.xlu0 %v687
    %v689 = vpop.xlane.xlu0 %688
    %v690 = vsel %vm686, %v683, -inf
    %691 = vmax.xlane.f32.xlu0 %v690
    %v692 = vpop.xlane.xlu0 %691
    %v693 = vsel %vm686, %v684, -inf
    %694 = vmax.xlane.f32.xlu0 %v693
    %v695 = vpop.xlane.xlu0 %694
    %v696 = vsel %vm686, %v685, -inf
    %697 = vmax.xlane.f32.xlu0 %v696
    %v698 = vpop.xlane.xlu0 %697
    %v699 = vsub.f32 %v682, %v689
    %v700 = vsub.f32 %v683, %v692
    %v701 = vsub.f32 %v684, %v695
    %v702 = vsub.f32 %v685, %v698
    %v703 = vmul.f32 %v699, 1.442695
    %v704 = vpow.pop %v703
    %v705 = vmul.f32 %v700, 1.442695
    %v706 = vpow.pop %v705
    %v707 = vmul.f32 %v701, 1.442695
    %v708 = vpow.pop %v707
    %v709 = vmul.f32 %v702, 1.442695
    %v710 = vpow.pop %v709
    %v711 = vsel %vm686, %v704, 0.0
    %712 = vadd.xlane.f32.xlu0 %v711
    %v713 = vpop.xlane.xlu0 %712
    %v714 = vsel %vm686, %v706, 0.0
    %715 = vadd.xlane.f32.xlu0 %v714
    %v716 = vpop.xlane.xlu0 %715
    %v717 = vsel %vm686, %v708, 0.0
    %718 = vadd.xlane.f32.xlu0 %v717
    %v719 = vpop.xlane.xlu0 %718
    %v720 = vsel %vm686, %v710, 0.0
    %721 = vadd.xlane.f32.xlu0 %v720
    %v722 = vpop.xlane.xlu0 %721
    %v723 = vrcp.pop %v713
    %v724 = vrcp.pop %v716
    %v725 = vrcp.pop %v719
    %v726 = vrcp.pop %v722
    %v727 = vmul.f32 %v704, %v723
    %v728 = vmul.f32 %v706, %v724
    %v729 = vmul.f32 %v708, %v725
    %v730 = vmul.f32 %v710, %v726
    %v731 = vpack.c.bf16 %v728, %v727
    %v732 = vpack.c.bf16 %v730, %v729
    %v734 = vsel %vm686, %v731, 0
    %736 = vmatprep.subr.bf16.mxu0 0
    %737 = vmatpush1.bf16.msra.mxu0 %v572
    %738 = vmatprep.subr.bf16.mxu0 0
    %739 = vmatpush1.bf16.msra.mxu0 0
    %740 = vmatprep.subr.bf16.mxu0 0
    %741 = vmatpush1.bf16.msra.mxu0 0
    %742 = vmatprep.subr.bf16.mxu0 0
    %743 = vmatpush1.bf16.msra.mxu0 0
    %744 = vmatprep.subr.bf16.mxu0 0
    %745 = vmatpush1.bf16.msra.mxu0 0
    %746 = vmatprep.subr.bf16.mxu0 0
    %747 = vmatpush1.bf16.msra.mxu0 0
    %748 = vmatprep.subr.bf16.mxu0 0
    %749 = vmatpush1.bf16.msra.mxu0 0
    %750 = vmatprep.subr.bf16.mxu0 0
    %751 = vmatpush1.bf16.msra.mxu0 0
    %752 = vmatprep.subr.bf16.mxu0 0
    %753 = vmatpush1.bf16.msra.mxu0 0
    %754 = vmatprep.subr.bf16.mxu0 0
    %755 = vmatpush1.bf16.msra.mxu0 0
    %756 = vmatprep.subr.bf16.mxu0 0
    %757 = vmatpush1.bf16.msra.mxu0 0
    %758 = vmatprep.subr.bf16.mxu0 0
    %759 = vmatpush1.bf16.msra.mxu0 0
    %760 = vmatprep.subr.bf16.mxu0 0
    %761 = vmatpush1.bf16.msra.mxu0 0
    %762 = vmatprep.subr.bf16.mxu0 0
    %763 = vmatpush1.bf16.msra.mxu0 0
    %764 = vmatprep.subr.bf16.mxu0 0
    %765 = vmatpush1.bf16.msra.mxu0 0
    %766 = vmatprep.subr.bf16.mxu0 0
    %767 = vmatpush1.bf16.msra.mxu0 0
    %768 = vmatprep.mubr.bf16.mxu0 0
    %769 = vmatmul.mubr.bf16.gmra.mrb[0].mxu0 %v734
    %v770 = vpop.f32.mrb[0].mxu0
    %v771 = vadd.f32 0.0, %v770
    %v772 = vpop.f32.mrb[0].mxu0
    %v773 = vpop.f32.mrb[0].mxu0
    %v774 = vadd.f32 0.0, %v773
    %v775 = vpop.f32.mrb[0].mxu0
    %776 = vdwg.mxu0
    %v778 = vsel %vm686, %v732, 0
    %780 = vmatprep.subr.bf16.mxu0 0
    %781 = vmatpush1.bf16.msra.mxu0 %v575
    %782 = vmatprep.subr.bf16.mxu0 0
    %783 = vmatpush1.bf16.msra.mxu0 0
    %784 = vmatprep.subr.bf16.mxu0 0
    %785 = vmatpush1.bf16.msra.mxu0 0
    %786 = vmatprep.subr.bf16.mxu0 0
    %787 = vmatpush1.bf16.msra.mxu0 0
    %788 = vmatprep.subr.bf16.mxu0 0
    %789 = vmatpush1.bf16.msra.mxu0 0
    %790 = vmatprep.subr.bf16.mxu0 0
    %791 = vmatpush1.bf16.msra.mxu0 0
    %792 = vmatprep.subr.bf16.mxu0 0
    %793 = vmatpush1.bf16.msra.mxu0 0
    %794 = vmatprep.subr.bf16.mxu0 0
    %795 = vmatpush1.bf16.msra.mxu0 0
    %796 = vmatprep.subr.bf16.mxu0 0
    %797 = vmatpush1.bf16.msra.mxu0 0
    %798 = vmatprep.subr.bf16.mxu0 0
    %799 = vmatpush1.bf16.msra.mxu0 0
    %800 = vmatprep.subr.bf16.mxu0 0
    %801 = vmatpush1.bf16.msra.mxu0 0
    %802 = vmatprep.subr.bf16.mxu0 0
    %803 = vmatpush1.bf16.msra.mxu0 0
    %804 = vmatprep.subr.bf16.mxu0 0
    %805 = vmatpush1.bf16.msra.mxu0 0
    %806 = vmatprep.subr.bf16.mxu0 0
    %807 = vmatpush1.bf16.msra.mxu0 0
    %808 = vmatprep.subr.bf16.mxu0 0
    %809 = vmatpush1.bf16.msra.mxu0 0
    %810 = vmatprep.subr.bf16.mxu0 0
    %811 = vmatpush1.bf16.msra.mxu0 0
    %812 = vmatprep.mubr.bf16.mxu0 0
    %813 = vmatmul.mubr.bf16.gmra.mrb[0].mxu0 %v778
    %v814 = vpop.f32.mrb[0].mxu0
    %v815 = vadd.f32 0.0, %v814
    %v816 = vpop.f32.mrb[0].mxu0
    %v817 = vpop.f32.mrb[0].mxu0
    %v818 = vadd.f32 0.0, %v817
    %v819 = vpop.f32.mrb[0].mxu0
    %820 = vdwg.mxu0
    %822 = vrot.lane.b32.xlu0 %v570, 96
    %v823 = vpop.permute.xlu0 %822
    %825 = vrot.lane.b32.xlu0 %v571, 96
    %v826 = vpop.permute.xlu0 %825
    %v828 = vsel %vm583, %v823, 0
    %v831 = vsel %vm583, %v826, 0
    %833 = vmatprep.subr.bf16.mxu0 0
    %834 = vmatpush1.bf16.xpose.msra.mxu0 %v831
    %835 = vmatprep.subr.bf16.mxu0 0
    %836 = vmatpush1.bf16.xpose.msra.mxu0 0
    %837 = vmatprep.subr.bf16.mxu0 0
    %838 = vmatpush1.bf16.xpose.msra.mxu0 0
    %839 = vmatprep.subr.bf16.mxu0 0
    %840 = vmatpush1.bf16.xpose.msra.mxu0 0
    %841 = vmatprep.subr.bf16.mxu0 0
    %842 = vmatpush1.bf16.xpose.msra.mxu0 0
    %843 = vmatprep.subr.bf16.mxu0 0
    %844 = vmatpush1.bf16.xpose.msra.mxu0 0
    %845 = vmatprep.subr.bf16.mxu0 0
    %846 = vmatpush1.bf16.xpose.msra.mxu0 0
    %847 = vmatprep.subr.bf16.mxu0 0
    %848 = vmatpush1.bf16.xpose.msra.mxu0 0
    %849 = vmatprep.subr.bf16.mxu0 0
    %850 = vmatpush1.bf16.xpose.msra.mxu0 0
    %851 = vmatprep.subr.bf16.mxu0 0
    %852 = vmatpush1.bf16.xpose.msra.mxu0 0
    %853 = vmatprep.subr.bf16.mxu0 0
    %854 = vmatpush1.bf16.xpose.msra.mxu0 0
    %855 = vmatprep.subr.bf16.mxu0 0
    %856 = vmatpush1.bf16.xpose.msra.mxu0 0
    %857 = vmatprep.subr.bf16.mxu0 0
    %858 = vmatpush1.bf16.xpose.msra.mxu0 0
    %859 = vmatprep.subr.bf16.mxu0 0
    %860 = vmatpush1.bf16.xpose.msra.mxu0 0
    %861 = vmatprep.subr.bf16.mxu0 0
    %862 = vmatpush1.bf16.xpose.msra.mxu0 0
    %863 = vmatprep.subr.bf16.mxu0 0
    %864 = vmatpush1.bf16.xpose.msra.mxu0 0
    %865 = vmatprep.mubr.bf16.mxu0 0
    %866 = vmatmul.mubr.bf16.gmra.mrb[0].mxu0 %v828
    %v867 = vpop.f32.mrb[0].mxu0
    %v868 = vadd.f32 0.0, %v867
    %v869 = vpop.f32.mrb[0].mxu0
    %v870 = vpop.f32.mrb[0].mxu0
    %v871 = vadd.f32 0.0, %v870
    %v872 = vpop.f32.mrb[0].mxu0
    %873 = vdwg.mxu0
    %875 = vrot.lane.b32.xlu0 %v573, 96
    %v876 = vpop.permute.xlu0 %875
    %878 = vrot.lane.b32.xlu0 %v574, 96
    %v879 = vpop.permute.xlu0 %878
    %v881 = vsel %vm583, %v876, 0
    %v884 = vsel %vm583, %v879, 0
    %886 = vmatprep.subr.bf16.mxu0 0
    %887 = vmatpush1.bf16.xpose.msra.mxu0 %v884
    %888 = vmatprep.subr.bf16.mxu0 0
    %889 = vmatpush1.bf16.xpose.msra.mxu0 0
    %890 = vmatprep.subr.bf16.mxu0 0
    %891 = vmatpush1.bf16.xpose.msra.mxu0 0
    %892 = vmatprep.subr.bf16.mxu0 0
    %893 = vmatpush1.bf16.xpose.msra.mxu0 0
    %894 = vmatprep.subr.bf16.mxu0 0
    %895 = vmatpush1.bf16.xpose.msra.mxu0 0
    %896 = vmatprep.subr.bf16.mxu0 0
    %897 = vmatpush1.bf16.xpose.msra.mxu0 0
    %898 = vmatprep.subr.bf16.mxu0 0
    %899 = vmatpush1.bf16.xpose.msra.mxu0 0
    %900 = vmatprep.subr.bf16.mxu0 0
    %901 = vmatpush1.bf16.xpose.msra.mxu0 0
    %902 = vmatprep.subr.bf16.mxu0 0
    %903 = vmatpush1.bf16.xpose.msra.mxu0 0
    %904 = vmatprep.subr.bf16.mxu0 0
    %905 = vmatpush1.bf16.xpose.msra.mxu0 0
    %906 = vmatprep.subr.bf16.mxu0 0
    %907 = vmatpush1.bf16.xpose.msra.mxu0 0
    %908 = vmatprep.subr.bf16.mxu0 0
    %909 = vmatpush1.bf16.xpose.msra.mxu0 0
    %910 = vmatprep.subr.bf16.mxu0 0
    %911 = vmatpush1.bf16.xpose.msra.mxu0 0
    %912 = vmatprep.subr.bf16.mxu0 0
    %913 = vmatpush1.bf16.xpose.msra.mxu0 0
    %914 = vmatprep.subr.bf16.mxu0 0
    %915 = vmatpush1.bf16.xpose.msra.mxu0 0
    %916 = vmatprep.subr.bf16.mxu0 0
    %917 = vmatpush1.bf16.xpose.msra.mxu0 0
    %918 = vmatprep.mubr.bf16.mxu0 0
    %919 = vmatmul.mubr.bf16.gmra.mrb[0].mxu0 %v881
    %v920 = vpop.f32.mrb[0].mxu0
    %v921 = vadd.f32 0.0, %v920
    %v922 = vpop.f32.mrb[0].mxu0
    %v923 = vpop.f32.mrb[0].mxu0
    %v924 = vadd.f32 0.0, %v923
    %v925 = vpop.f32.mrb[0].mxu0
    %926 = vdwg.mxu0
    %v927 = vsel %vm680, %v868, -1e+30
    %v928 = vsel %vm681, %v871, -1e+30
    %v929 = vsel %vm680, %v921, -1e+30
    %v930 = vsel %vm681, %v924, -1e+30
    %v931 = vsel %vm686, %v927, -inf
    %932 = vmax.xlane.f32.xlu0 %v931
    %v933 = vpop.xlane.xlu0 %932
    %v934 = vsel %vm686, %v928, -inf
    %935 = vmax.xlane.f32.xlu0 %v934
    %v936 = vpop.xlane.xlu0 %935
    %v937 = vsel %vm686, %v929, -inf
    %938 = vmax.xlane.f32.xlu0 %v937
    %v939 = vpop.xlane.xlu0 %938
    %v940 = vsel %vm686, %v930, -inf
    %941 = vmax.xlane.f32.xlu0 %v940
    %v942 = vpop.xlane.xlu0 %941
    %v943 = vsub.f32 %v927, %v933
    %v944 = vsub.f32 %v928, %v936
    %v945 = vsub.f32 %v929, %v939
    %v946 = vsub.f32 %v930, %v942
    %v947 = vmul.f32 %v943, 1.442695
    %v948 = vpow.pop %v947
    %v949 = vmul.f32 %v944, 1.442695
    %v950 = vpow.pop %v949
    %v951 = vmul.f32 %v945, 1.442695
    %v952 = vpow.pop %v951
    %v953 = vmul.f32 %v946, 1.442695
    %v954 = vpow.pop %v953
    %v955 = vsel %vm686, %v948, 0.0
    %956 = vadd.xlane.f32.xlu0 %v955
    %v957 = vpop.xlane.xlu0 %956
    %v958 = vsel %vm686, %v950, 0.0
    %959 = vadd.xlane.f32.xlu0 %v958
    %v960 = vpop.xlane.xlu0 %959
    %v961 = vsel %vm686, %v952, 0.0
    %962 = vadd.xlane.f32.xlu0 %v961
    %v963 = vpop.xlane.xlu0 %962
    %v964 = vsel %vm686, %v954, 0.0
    %965 = vadd.xlane.f32.xlu0 %v964
    %v966 = vpop.xlane.xlu0 %965
    %v967 = vrcp.pop %v957
    %v968 = vrcp.pop %v960
    %v969 = vrcp.pop %v963
    %v970 = vrcp.pop %v966
    %v971 = vmul.f32 %v948, %v967
    %v972 = vmul.f32 %v950, %v968
    %v973 = vmul.f32 %v952, %v969
    %v974 = vmul.f32 %v954, %v970
    %v975 = vpack.c.bf16 %v972, %v971
    %v976 = vpack.c.bf16 %v974, %v973
    %978 = vrot.lane.b32.xlu0 %v572, 96
    %v979 = vpop.permute.xlu0 %978
    %v982 = vsel %vm686, %v975, 0
    %984 = vmatprep.subr.bf16.mxu0 0
    %985 = vmatpush1.bf16.msra.mxu0 %v979
    %986 = vmatprep.subr.bf16.mxu0 0
    %987 = vmatpush1.bf16.msra.mxu0 0
    %988 = vmatprep.subr.bf16.mxu0 0
    %989 = vmatpush1.bf16.msra.mxu0 0
    %990 = vmatprep.subr.bf16.mxu0 0
    %991 = vmatpush1.bf16.msra.mxu0 0
    %992 = vmatprep.subr.bf16.mxu0 0
    %993 = vmatpush1.bf16.msra.mxu0 0
    %994 = vmatprep.subr.bf16.mxu0 0
    %995 = vmatpush1.bf16.msra.mxu0 0
    %996 = vmatprep.subr.bf16.mxu0 0
    %997 = vmatpush1.bf16.msra.mxu0 0
    %998 = vmatprep.subr.bf16.mxu0 0
    %999 = vmatpush1.bf16.msra.mxu0 0
    %1000 = vmatprep.subr.bf16.mxu0 0
    %1001 = vmatpush1.bf16.msra.mxu0 0
    %1002 = vmatprep.subr.bf16.mxu0 0
    %1003 = vmatpush1.bf16.msra.mxu0 0
    %1004 = vmatprep.subr.bf16.mxu0 0
    %1005 = vmatpush1.bf16.msra.mxu0 0
    %1006 = vmatprep.subr.bf16.mxu0 0
    %1007 = vmatpush1.bf16.msra.mxu0 0
    %1008 = vmatprep.subr.bf16.mxu0 0
    %1009 = vmatpush1.bf16.msra.mxu0 0
    %1010 = vmatprep.subr.bf16.mxu0 0
    %1011 = vmatpush1.bf16.msra.mxu0 0
    %1012 = vmatprep.subr.bf16.mxu0 0
    %1013 = vmatpush1.bf16.msra.mxu0 0
    %1014 = vmatprep.subr.bf16.mxu0 0
    %1015 = vmatpush1.bf16.msra.mxu0 0
    %1016 = vmatprep.mubr.bf16.mxu0 0
    %1017 = vmatmul.mubr.bf16.gmra.mrb[0].mxu0 %v982
    %v1018 = vpop.f32.mrb[0].mxu0
    %v1019 = vadd.f32 0.0, %v1018
    %v1020 = vpop.f32.mrb[0].mxu0
    %v1021 = vpop.f32.mrb[0].mxu0
    %v1022 = vadd.f32 0.0, %v1021
    %v1023 = vpop.f32.mrb[0].mxu0
    %1024 = vdwg.mxu0
    %1026 = vrot.lane.b32.xlu0 %v575, 96
    %v1027 = vpop.permute.xlu0 %1026
    %v1030 = vsel %vm686, %v976, 0
    %1032 = vmatprep.subr.bf16.mxu0 0
    %1033 = vmatpush1.bf16.msra.mxu0 %v1027
    %1034 = vmatprep.subr.bf16.mxu0 0
    %1035 = vmatpush1.bf16.msra.mxu0 0
    %1036 = vmatprep.subr.bf16.mxu0 0
    %1037 = vmatpush1.bf16.msra.mxu0 0
    %1038 = vmatprep.subr.bf16.mxu0 0
    %1039 = vmatpush1.bf16.msra.mxu0 0
    %1040 = vmatprep.subr.bf16.mxu0 0
    %1041 = vmatpush1.bf16.msra.mxu0 0
    %1042 = vmatprep.subr.bf16.mxu0 0
    %1043 = vmatpush1.bf16.msra.mxu0 0
    %1044 = vmatprep.subr.bf16.mxu0 0
    %1045 = vmatpush1.bf16.msra.mxu0 0
    %1046 = vmatprep.subr.bf16.mxu0 0
    %1047 = vmatpush1.bf16.msra.mxu0 0
    %1048 = vmatprep.subr.bf16.mxu0 0
    %1049 = vmatpush1.bf16.msra.mxu0 0
    %1050 = vmatprep.subr.bf16.mxu0 0
    %1051 = vmatpush1.bf16.msra.mxu0 0
    %1052 = vmatprep.subr.bf16.mxu0 0
    %1053 = vmatpush1.bf16.msra.mxu0 0
    %1054 = vmatprep.subr.bf16.mxu0 0
    %1055 = vmatpush1.bf16.msra.mxu0 0
    %1056 = vmatprep.subr.bf16.mxu0 0
    %1057 = vmatpush1.bf16.msra.mxu0 0
    %1058 = vmatprep.subr.bf16.mxu0 0
    %1059 = vmatpush1.bf16.msra.mxu0 0
    %1060 = vmatprep.subr.bf16.mxu0 0
    %1061 = vmatpush1.bf16.msra.mxu0 0
    %1062 = vmatprep.subr.bf16.mxu0 0
    %1063 = vmatpush1.bf16.msra.mxu0 0
    %1064 = vmatprep.mubr.bf16.mxu0 0
    %1065 = vmatmul.mubr.bf16.gmra.mrb[0].mxu0 %v1030
    %v1066 = vpop.f32.mrb[0].mxu0
    %v1067 = vadd.f32 0.0, %v1066
    %v1068 = vpop.f32.mrb[0].mxu0
    %v1069 = vpop.f32.mrb[0].mxu0
    %v1070 = vadd.f32 0.0, %v1069
    %v1071 = vpop.f32.mrb[0].mxu0
    %1072 = vdwg.mxu0
    %1073 = vrot.lane.b32.xlu0 %v570, 64
    %v1074 = vpop.permute.xlu0 %1073
    %1075 = vrot.lane.b32.xlu0 %v571, 64
    %v1076 = vpop.permute.xlu0 %1075
    %v1078 = vsel %vm583, %v1074, 0
    %v1081 = vsel %vm583, %v1076, 0
    %1083 = vmatprep.subr.bf16.mxu0 0
    %1084 = vmatpush1.bf16.xpose.msra.mxu0 %v1081
    %1085 = vmatprep.subr.bf16.mxu0 0
    %1086 = vmatpush1.bf16.xpose.msra.mxu0 0
    %1087 = vmatprep.subr.bf16.mxu0 0
    %1088 = vmatpush1.bf16.xpose.msra.mxu0 0
    %1089 = vmatprep.subr.bf16.mxu0 0
    %1090 = vmatpush1.bf16.xpose.msra.mxu0 0
    %1091 = vmatprep.subr.bf16.mxu0 0
    %1092 = vmatpush1.bf16.xpose.msra.mxu0 0
    %1093 = vmatprep.subr.bf16.mxu0 0
    %1094 = vmatpush1.bf16.xpose.msra.mxu0 0
    %1095 = vmatprep.subr.bf16.mxu0 0
    %1096 = vmatpush1.bf16.xpose.msra.mxu0 0
    %1097 = vmatprep.subr.bf16.mxu0 0
    %1098 = vmatpush1.bf16.xpose.msra.mxu0 0
    %1099 = vmatprep.subr.bf16.mxu0 0
    %1100 = vmatpush1.bf16.xpose.msra.mxu0 0
    %1101 = vmatprep.subr.bf16.mxu0 0
    %1102 = vmatpush1.bf16.xpose.msra.mxu0 0
    %1103 = vmatprep.subr.bf16.mxu0 0
    %1104 = vmatpush1.bf16.xpose.msra.mxu0 0
    %1105 = vmatprep.subr.bf16.mxu0 0
    %1106 = vmatpush1.bf16.xpose.msra.mxu0 0
    %1107 = vmatprep.subr.bf16.mxu0 0
    %1108 = vmatpush1.bf16.xpose.msra.mxu0 0
    %1109 = vmatprep.subr.bf16.mxu0 0
    %1110 = vmatpush1.bf16.xpose.msra.mxu0 0
    %1111 = vmatprep.subr.bf16.mxu0 0
    %1112 = vmatpush1.bf16.xpose.msra.mxu0 0
    %1113 = vmatprep.subr.bf16.mxu0 0
    %1114 = vmatpush1.bf16.xpose.msra.mxu0 0
    %1115 = vmatprep.mubr.bf16.mxu0 0
    %1116 = vmatmul.mubr.bf16.gmra.mrb[0].mxu0 %v1078
    %v1117 = vpop.f32.mrb[0].mxu0
    %v1118 = vadd.f32 0.0, %v1117
    %v1119 = vpop.f32.mrb[0].mxu0
    %v1120 = vpop.f32.mrb[0].mxu0
    %v1121 = vadd.f32 0.0, %v1120
    %v1122 = vpop.f32.mrb[0].mxu0
    %1123 = vdwg.mxu0
    %1124 = vrot.lane.b32.xlu0 %v573, 64
    %v1125 = vpop.permute.xlu0 %1124
    %1126 = vrot.lane.b32.xlu0 %v574, 64
    %v1127 = vpop.permute.xlu0 %1126
    %v1129 = vsel %vm583, %v1125, 0
    %v1132 = vsel %vm583, %v1127, 0
    %1134 = vmatprep.subr.bf16.mxu0 0
    %1135 = vmatpush1.bf16.xpose.msra.mxu0 %v1132
    %1136 = vmatprep.subr.bf16.mxu0 0
    %1137 = vmatpush1.bf16.xpose.msra.mxu0 0
    %1138 = vmatprep.subr.bf16.mxu0 0
    %1139 = vmatpush1.bf16.xpose.msra.mxu0 0
    %1140 = vmatprep.subr.bf16.mxu0 0
    %1141 = vmatpush1.bf16.xpose.msra.mxu0 0
    %1142 = vmatprep.subr.bf16.mxu0 0
    %1143 = vmatpush1.bf16.xpose.msra.mxu0 0
    %1144 = vmatprep.subr.bf16.mxu0 0
    %1145 = vmatpush1.bf16.xpose.msra.mxu0 0
    %1146 = vmatprep.subr.bf16.mxu0 0
    %1147 = vmatpush1.bf16.xpose.msra.mxu0 0
    %1148 = vmatprep.subr.bf16.mxu0 0
    %1149 = vmatpush1.bf16.xpose.msra.mxu0 0
    %1150 = vmatprep.subr.bf16.mxu0 0
    %1151 = vmatpush1.bf16.xpose.msra.mxu0 0
    %1152 = vmatprep.subr.bf16.mxu0 0
    %1153 = vmatpush1.bf16.xpose.msra.mxu0 0
    %1154 = vmatprep.subr.bf16.mxu0 0
    %1155 = vmatpush1.bf16.xpose.msra.mxu0 0
    %1156 = vmatprep.subr.bf16.mxu0 0
    %1157 = vmatpush1.bf16.xpose.msra.mxu0 0
    %1158 = vmatprep.subr.bf16.mxu0 0
    %1159 = vmatpush1.bf16.xpose.msra.mxu0 0
    %1160 = vmatprep.subr.bf16.mxu0 0
    %1161 = vmatpush1.bf16.xpose.msra.mxu0 0
    %1162 = vmatprep.subr.bf16.mxu0 0
    %1163 = vmatpush1.bf16.xpose.msra.mxu0 0
    %1164 = vmatprep.subr.bf16.mxu0 0
    %1165 = vmatpush1.bf16.xpose.msra.mxu0 0
    %1166 = vmatprep.mubr.bf16.mxu0 0
    %1167 = vmatmul.mubr.bf16.gmra.mrb[0].mxu0 %v1129
    %v1168 = vpop.f32.mrb[0].mxu0
    %v1169 = vadd.f32 0.0, %v1168
    %v1170 = vpop.f32.mrb[0].mxu0
    %v1171 = vpop.f32.mrb[0].mxu0
    %v1172 = vadd.f32 0.0, %v1171
    %v1173 = vpop.f32.mrb[0].mxu0
    %1174 = vdwg.mxu0
    %v1175 = vsel %vm680, %v1118, -1e+30
    %v1176 = vsel %vm681, %v1121, -1e+30
    %v1177 = vsel %vm680, %v1169, -1e+30
    %v1178 = vsel %vm681, %v1172, -1e+30
    %v1179 = vsel %vm686, %v1175, -inf
    %1180 = vmax.xlane.f32.xlu0 %v1179
    %v1181 = vpop.xlane.xlu0 %1180
    %v1182 = vsel %vm686, %v1176, -inf
    %1183 = vmax.xlane.f32.xlu0 %v1182
    %v1184 = vpop.xlane.xlu0 %1183
    %v1185 = vsel %vm686, %v1177, -inf
    %1186 = vmax.xlane.f32.xlu0 %v1185
    %v1187 = vpop.xlane.xlu0 %1186
    %v1188 = vsel %vm686, %v1178, -inf
    %1189 = vmax.xlane.f32.xlu0 %v1188
    %v1190 = vpop.xlane.xlu0 %1189
    %v1191 = vsub.f32 %v1175, %v1181
    %v1192 = vsub.f32 %v1176, %v1184
    %v1193 = vsub.f32 %v1177, %v1187
    %v1194 = vsub.f32 %v1178, %v1190
    %v1195 = vmul.f32 %v1191, 1.442695
    %v1196 = vpow.pop %v1195
    %v1197 = vmul.f32 %v1192, 1.442695
    %v1198 = vpow.pop %v1197
    %v1199 = vmul.f32 %v1193, 1.442695
    %v1200 = vpow.pop %v1199
    %v1201 = vmul.f32 %v1194, 1.442695
    %v1202 = vpow.pop %v1201
    %v1203 = vsel %vm686, %v1196, 0.0
    %1204 = vadd.xlane.f32.xlu0 %v1203
    %v1205 = vpop.xlane.xlu0 %1204
    %v1206 = vsel %vm686, %v1198, 0.0
    %1207 = vadd.xlane.f32.xlu0 %v1206
    %v1208 = vpop.xlane.xlu0 %1207
    %v1209 = vsel %vm686, %v1200, 0.0
    %1210 = vadd.xlane.f32.xlu0 %v1209
    %v1211 = vpop.xlane.xlu0 %1210
    %v1212 = vsel %vm686, %v1202, 0.0
    %1213 = vadd.xlane.f32.xlu0 %v1212
    %v1214 = vpop.xlane.xlu0 %1213
    %v1215 = vrcp.pop %v1205
    %v1216 = vrcp.pop %v1208
    %v1217 = vrcp.pop %v1211
    %v1218 = vrcp.pop %v1214
    %v1219 = vmul.f32 %v1196, %v1215
    %v1220 = vmul.f32 %v1198, %v1216
    %v1221 = vmul.f32 %v1200, %v1217
    %v1222 = vmul.f32 %v1202, %v1218
    %v1223 = vpack.c.bf16 %v1220, %v1219
    %v1224 = vpack.c.bf16 %v1222, %v1221
    %1225 = vrot.lane.b32.xlu0 %v572, 64
    %v1226 = vpop.permute.xlu0 %1225
    %v1229 = vsel %vm686, %v1223, 0
    %1231 = vmatprep.subr.bf16.mxu0 0
    %1232 = vmatpush1.bf16.msra.mxu0 %v1226
    %1233 = vmatprep.subr.bf16.mxu0 0
    %1234 = vmatpush1.bf16.msra.mxu0 0
    %1235 = vmatprep.subr.bf16.mxu0 0
    %1236 = vmatpush1.bf16.msra.mxu0 0
    %1237 = vmatprep.subr.bf16.mxu0 0
    %1238 = vmatpush1.bf16.msra.mxu0 0
    %1239 = vmatprep.subr.bf16.mxu0 0
    %1240 = vmatpush1.bf16.msra.mxu0 0
    %1241 = vmatprep.subr.bf16.mxu0 0
    %1242 = vmatpush1.bf16.msra.mxu0 0
    %1243 = vmatprep.subr.bf16.mxu0 0
    %1244 = vmatpush1.bf16.msra.mxu0 0
    %1245 = vmatprep.subr.bf16.mxu0 0
    %1246 = vmatpush1.bf16.msra.mxu0 0
    %1247 = vmatprep.subr.bf16.mxu0 0
    %1248 = vmatpush1.bf16.msra.mxu0 0
    %1249 = vmatprep.subr.bf16.mxu0 0
    %1250 = vmatpush1.bf16.msra.mxu0 0
    %1251 = vmatprep.subr.bf16.mxu0 0
    %1252 = vmatpush1.bf16.msra.mxu0 0
    %1253 = vmatprep.subr.bf16.mxu0 0
    %1254 = vmatpush1.bf16.msra.mxu0 0
    %1255 = vmatprep.subr.bf16.mxu0 0
    %1256 = vmatpush1.bf16.msra.mxu0 0
    %1257 = vmatprep.subr.bf16.mxu0 0
    %1258 = vmatpush1.bf16.msra.mxu0 0
    %1259 = vmatprep.subr.bf16.mxu0 0
    %1260 = vmatpush1.bf16.msra.mxu0 0
    %1261 = vmatprep.subr.bf16.mxu0 0
    %1262 = vmatpush1.bf16.msra.mxu0 0
    %1263 = vmatprep.mubr.bf16.mxu0 0
    %1264 = vmatmul.mubr.bf16.gmra.mrb[0].mxu0 %v1229
    %v1265 = vpop.f32.mrb[0].mxu0
    %v1266 = vadd.f32 0.0, %v1265
    %v1267 = vpop.f32.mrb[0].mxu0
    %v1268 = vpop.f32.mrb[0].mxu0
    %v1269 = vadd.f32 0.0, %v1268
    %v1270 = vpop.f32.mrb[0].mxu0
    %1271 = vdwg.mxu0
    %1272 = vrot.lane.b32.xlu0 %v575, 64
    %v1273 = vpop.permute.xlu0 %1272
    %v1276 = vsel %vm686, %v1224, 0
    %1278 = vmatprep.subr.bf16.mxu0 0
    %1279 = vmatpush1.bf16.msra.mxu0 %v1273
    %1280 = vmatprep.subr.bf16.mxu0 0
    %1281 = vmatpush1.bf16.msra.mxu0 0
    %1282 = vmatprep.subr.bf16.mxu0 0
    %1283 = vmatpush1.bf16.msra.mxu0 0
    %1284 = vmatprep.subr.bf16.mxu0 0
    %1285 = vmatpush1.bf16.msra.mxu0 0
    %1286 = vmatprep.subr.bf16.mxu0 0
    %1287 = vmatpush1.bf16.msra.mxu0 0
    %1288 = vmatprep.subr.bf16.mxu0 0
    %1289 = vmatpush1.bf16.msra.mxu0 0
    %1290 = vmatprep.subr.bf16.mxu0 0
    %1291 = vmatpush1.bf16.msra.mxu0 0
    %1292 = vmatprep.subr.bf16.mxu0 0
    %1293 = vmatpush1.bf16.msra.mxu0 0
    %1294 = vmatprep.subr.bf16.mxu0 0
    %1295 = vmatpush1.bf16.msra.mxu0 0
    %1296 = vmatprep.subr.bf16.mxu0 0
    %1297 = vmatpush1.bf16.msra.mxu0 0
    %1298 = vmatprep.subr.bf16.mxu0 0
    %1299 = vmatpush1.bf16.msra.mxu0 0
    %1300 = vmatprep.subr.bf16.mxu0 0
    %1301 = vmatpush1.bf16.msra.mxu0 0
    %1302 = vmatprep.subr.bf16.mxu0 0
    %1303 = vmatpush1.bf16.msra.mxu0 0
    %1304 = vmatprep.subr.bf16.mxu0 0
    %1305 = vmatpush1.bf16.msra.mxu0 0
    %1306 = vmatprep.subr.bf16.mxu0 0
    %1307 = vmatpush1.bf16.msra.mxu0 0
    %1308 = vmatprep.subr.bf16.mxu0 0
    %1309 = vmatpush1.bf16.msra.mxu0 0
    %1310 = vmatprep.mubr.bf16.mxu0 0
    %1311 = vmatmul.mubr.bf16.gmra.mrb[0].mxu0 %v1276
    %v1312 = vpop.f32.mrb[0].mxu0
    %v1313 = vadd.f32 0.0, %v1312
    %v1314 = vpop.f32.mrb[0].mxu0
    %v1315 = vpop.f32.mrb[0].mxu0
    %v1316 = vadd.f32 0.0, %v1315
    %v1317 = vpop.f32.mrb[0].mxu0
    %1318 = vdwg.mxu0
    %1319 = vrot.lane.b32.xlu0 %v570, 32
    %v1320 = vpop.permute.xlu0 %1319
    %1321 = vrot.lane.b32.xlu0 %v571, 32
    %v1322 = vpop.permute.xlu0 %1321
    %v1324 = vsel %vm583, %v1320, 0
    %v1327 = vsel %vm583, %v1322, 0
    %1329 = vmatprep.subr.bf16.mxu0 0
    %1330 = vmatpush1.bf16.xpose.msra.mxu0 %v1327
    %1331 = vmatprep.subr.bf16.mxu0 0
    %1332 = vmatpush1.bf16.xpose.msra.mxu0 0
    %1333 = vmatprep.subr.bf16.mxu0 0
    %1334 = vmatpush1.bf16.xpose.msra.mxu0 0
    %1335 = vmatprep.subr.bf16.mxu0 0
    %1336 = vmatpush1.bf16.xpose.msra.mxu0 0
    %1337 = vmatprep.subr.bf16.mxu0 0
    %1338 = vmatpush1.bf16.xpose.msra.mxu0 0
    %1339 = vmatprep.subr.bf16.mxu0 0
    %1340 = vmatpush1.bf16.xpose.msra.mxu0 0
    %1341 = vmatprep.subr.bf16.mxu0 0
    %1342 = vmatpush1.bf16.xpose.msra.mxu0 0
    %1343 = vmatprep.subr.bf16.mxu0 0
    %1344 = vmatpush1.bf16.xpose.msra.mxu0 0
    %1345 = vmatprep.subr.bf16.mxu0 0
    %1346 = vmatpush1.bf16.xpose.msra.mxu0 0
    %1347 = vmatprep.subr.bf16.mxu0 0
    %1348 = vmatpush1.bf16.xpose.msra.mxu0 0
    %1349 = vmatprep.subr.bf16.mxu0 0
    %1350 = vmatpush1.bf16.xpose.msra.mxu0 0
    %1351 = vmatprep.subr.bf16.mxu0 0
    %1352 = vmatpush1.bf16.xpose.msra.mxu0 0
    %1353 = vmatprep.subr.bf16.mxu0 0
    %1354 = vmatpush1.bf16.xpose.msra.mxu0 0
    %1355 = vmatprep.subr.bf16.mxu0 0
    %1356 = vmatpush1.bf16.xpose.msra.mxu0 0
    %1357 = vmatprep.subr.bf16.mxu0 0
    %1358 = vmatpush1.bf16.xpose.msra.mxu0 0
    %1359 = vmatprep.subr.bf16.mxu0 0
    %1360 = vmatpush1.bf16.xpose.msra.mxu0 0
    %1361 = vmatprep.mubr.bf16.mxu0 0
    %1362 = vmatmul.mubr.bf16.gmra.mrb[0].mxu0 %v1324
    %v1363 = vpop.f32.mrb[0].mxu0
    %v1364 = vadd.f32 0.0, %v1363
    %v1365 = vpop.f32.mrb[0].mxu0
    %v1366 = vpop.f32.mrb[0].mxu0
    %v1367 = vadd.f32 0.0, %v1366
    %v1368 = vpop.f32.mrb[0].mxu0
    %1369 = vdwg.mxu0
    %1370 = vrot.lane.b32.xlu0 %v573, 32
    %v1371 = vpop.permute.xlu0 %1370
    %1372 = vrot.lane.b32.xlu0 %v574, 32
    %v1373 = vpop.permute.xlu0 %1372
    %v1375 = vsel %vm583, %v1371, 0
    %v1378 = vsel %vm583, %v1373, 0
    %1380 = vmatprep.subr.bf16.mxu0 0
    %1381 = vmatpush1.bf16.xpose.msra.mxu0 %v1378
    %1382 = vmatprep.subr.bf16.mxu0 0
    %1383 = vmatpush1.bf16.xpose.msra.mxu0 0
    %1384 = vmatprep.subr.bf16.mxu0 0
    %1385 = vmatpush1.bf16.xpose.msra.mxu0 0
    %1386 = vmatprep.subr.bf16.mxu0 0
    %1387 = vmatpush1.bf16.xpose.msra.mxu0 0
    %1388 = vmatprep.subr.bf16.mxu0 0
    %1389 = vmatpush1.bf16.xpose.msra.mxu0 0
    %1390 = vmatprep.subr.bf16.mxu0 0
    %1391 = vmatpush1.bf16.xpose.msra.mxu0 0
    %1392 = vmatprep.subr.bf16.mxu0 0
    %1393 = vmatpush1.bf16.xpose.msra.mxu0 0
    %1394 = vmatprep.subr.bf16.mxu0 0
    %1395 = vmatpush1.bf16.xpose.msra.mxu0 0
    %1396 = vmatprep.subr.bf16.mxu0 0
    %1397 = vmatpush1.bf16.xpose.msra.mxu0 0
    %1398 = vmatprep.subr.bf16.mxu0 0
    %1399 = vmatpush1.bf16.xpose.msra.mxu0 0
    %1400 = vmatprep.subr.bf16.mxu0 0
    %1401 = vmatpush1.bf16.xpose.msra.mxu0 0
    %1402 = vmatprep.subr.bf16.mxu0 0
    %1403 = vmatpush1.bf16.xpose.msra.mxu0 0
    %1404 = vmatprep.subr.bf16.mxu0 0
    %1405 = vmatpush1.bf16.xpose.msra.mxu0 0
    %1406 = vmatprep.subr.bf16.mxu0 0
    %1407 = vmatpush1.bf16.xpose.msra.mxu0 0
    %1408 = vmatprep.subr.bf16.mxu0 0
    %1409 = vmatpush1.bf16.xpose.msra.mxu0 0
    %1410 = vmatprep.subr.bf16.mxu0 0
    %1411 = vmatpush1.bf16.xpose.msra.mxu0 0
    %1412 = vmatprep.mubr.bf16.mxu0 0
    %1413 = vmatmul.mubr.bf16.gmra.mrb[0].mxu0 %v1375
    %v1414 = vpop.f32.mrb[0].mxu0
    %v1415 = vadd.f32 0.0, %v1414
    %v1416 = vpop.f32.mrb[0].mxu0
    %v1417 = vpop.f32.mrb[0].mxu0
    %v1418 = vadd.f32 0.0, %v1417
    %v1419 = vpop.f32.mrb[0].mxu0
    %1420 = vdwg.mxu0
    %v1421 = vsel %vm680, %v1364, -1e+30
    %v1422 = vsel %vm681, %v1367, -1e+30
    %v1423 = vsel %vm680, %v1415, -1e+30
    %v1424 = vsel %vm681, %v1418, -1e+30
    %v1425 = vsel %vm686, %v1421, -inf
    %1426 = vmax.xlane.f32.xlu0 %v1425
    %v1427 = vpop.xlane.xlu0 %1426
    %v1428 = vsel %vm686, %v1422, -inf
    %1429 = vmax.xlane.f32.xlu0 %v1428
    %v1430 = vpop.xlane.xlu0 %1429
    %v1431 = vsel %vm686, %v1423, -inf
    %1432 = vmax.xlane.f32.xlu0 %v1431
    %v1433 = vpop.xlane.xlu0 %1432
    %v1434 = vsel %vm686, %v1424, -inf
    %1435 = vmax.xlane.f32.xlu0 %v1434
    %v1436 = vpop.xlane.xlu0 %1435
    %v1437 = vsub.f32 %v1421, %v1427
    %v1438 = vsub.f32 %v1422, %v1430
    %v1439 = vsub.f32 %v1423, %v1433
    %v1440 = vsub.f32 %v1424, %v1436
    %v1441 = vmul.f32 %v1437, 1.442695
    %v1442 = vpow.pop %v1441
    %v1443 = vmul.f32 %v1438, 1.442695
    %v1444 = vpow.pop %v1443
    %v1445 = vmul.f32 %v1439, 1.442695
    %v1446 = vpow.pop %v1445
    %v1447 = vmul.f32 %v1440, 1.442695
    %v1448 = vpow.pop %v1447
    %v1449 = vsel %vm686, %v1442, 0.0
    %1450 = vadd.xlane.f32.xlu0 %v1449
    %v1451 = vpop.xlane.xlu0 %1450
    %v1452 = vsel %vm686, %v1444, 0.0
    %1453 = vadd.xlane.f32.xlu0 %v1452
    %v1454 = vpop.xlane.xlu0 %1453
    %v1455 = vsel %vm686, %v1446, 0.0
    %1456 = vadd.xlane.f32.xlu0 %v1455
    %v1457 = vpop.xlane.xlu0 %1456
    %v1458 = vsel %vm686, %v1448, 0.0
    %1459 = vadd.xlane.f32.xlu0 %v1458
    %v1460 = vpop.xlane.xlu0 %1459
    %v1461 = vrcp.pop %v1451
    %v1462 = vrcp.pop %v1454
    %v1463 = vrcp.pop %v1457
    %v1464 = vrcp.pop %v1460
    %v1465 = vmul.f32 %v1442, %v1461
    %v1466 = vmul.f32 %v1444, %v1462
    %v1467 = vmul.f32 %v1446, %v1463
    %v1468 = vmul.f32 %v1448, %v1464
    %v1469 = vpack.c.bf16 %v1466, %v1465
    %v1470 = vpack.c.bf16 %v1468, %v1467
    %1471 = vrot.lane.b32.xlu0 %v572, 32
    %v1472 = vpop.permute.xlu0 %1471
    %v1475 = vsel %vm686, %v1469, 0
    %1477 = vmatprep.subr.bf16.mxu0 0
    %1478 = vmatpush1.bf16.msra.mxu0 %v1472
    %1479 = vmatprep.subr.bf16.mxu0 0
    %1480 = vmatpush1.bf16.msra.mxu0 0
    %1481 = vmatprep.subr.bf16.mxu0 0
    %1482 = vmatpush1.bf16.msra.mxu0 0
    %1483 = vmatprep.subr.bf16.mxu0 0
    %1484 = vmatpush1.bf16.msra.mxu0 0
    %1485 = vmatprep.subr.bf16.mxu0 0
    %1486 = vmatpush1.bf16.msra.mxu0 0
    %1487 = vmatprep.subr.bf16.mxu0 0
    %1488 = vmatpush1.bf16.msra.mxu0 0
    %1489 = vmatprep.subr.bf16.mxu0 0
    %1490 = vmatpush1.bf16.msra.mxu0 0
    %1491 = vmatprep.subr.bf16.mxu0 0
    %1492 = vmatpush1.bf16.msra.mxu0 0
    %1493 = vmatprep.subr.bf16.mxu0 0
    %1494 = vmatpush1.bf16.msra.mxu0 0
    %1495 = vmatprep.subr.bf16.mxu0 0
    %1496 = vmatpush1.bf16.msra.mxu0 0
    %1497 = vmatprep.subr.bf16.mxu0 0
    %1498 = vmatpush1.bf16.msra.mxu0 0
    %1499 = vmatprep.subr.bf16.mxu0 0
    %1500 = vmatpush1.bf16.msra.mxu0 0
    %1501 = vmatprep.subr.bf16.mxu0 0
    %1502 = vmatpush1.bf16.msra.mxu0 0
    %1503 = vmatprep.subr.bf16.mxu0 0
    %1504 = vmatpush1.bf16.msra.mxu0 0
    %1505 = vmatprep.subr.bf16.mxu0 0
    %1506 = vmatpush1.bf16.msra.mxu0 0
    %1507 = vmatprep.subr.bf16.mxu0 0
    %1508 = vmatpush1.bf16.msra.mxu0 0
    %1509 = vmatprep.mubr.bf16.mxu0 0
    %1510 = vmatmul.mubr.bf16.gmra.mrb[0].mxu0 %v1475
    %v1511 = vpop.f32.mrb[0].mxu0
    %v1512 = vadd.f32 0.0, %v1511
    %v1513 = vpop.f32.mrb[0].mxu0
    %v1514 = vpop.f32.mrb[0].mxu0
    %v1515 = vadd.f32 0.0, %v1514
    %v1516 = vpop.f32.mrb[0].mxu0
    %1517 = vdwg.mxu0
    %1518 = vrot.lane.b32.xlu0 %v575, 32
    %v1519 = vpop.permute.xlu0 %1518
    %v1522 = vsel %vm686, %v1470, 0
    %1524 = vmatprep.subr.bf16.mxu0 0
    %1525 = vmatpush1.bf16.msra.mxu0 %v1519
    %1526 = vmatprep.subr.bf16.mxu0 0
    %1527 = vmatpush1.bf16.msra.mxu0 0
    %1528 = vmatprep.subr.bf16.mxu0 0
    %1529 = vmatpush1.bf16.msra.mxu0 0
    %1530 = vmatprep.subr.bf16.mxu0 0
    %1531 = vmatpush1.bf16.msra.mxu0 0
    %1532 = vmatprep.subr.bf16.mxu0 0
    %1533 = vmatpush1.bf16.msra.mxu0 0
    %1534 = vmatprep.subr.bf16.mxu0 0
    %1535 = vmatpush1.bf16.msra.mxu0 0
    %1536 = vmatprep.subr.bf16.mxu0 0
    %1537 = vmatpush1.bf16.msra.mxu0 0
    %1538 = vmatprep.subr.bf16.mxu0 0
    %1539 = vmatpush1.bf16.msra.mxu0 0
    %1540 = vmatprep.subr.bf16.mxu0 0
    %1541 = vmatpush1.bf16.msra.mxu0 0
    %1542 = vmatprep.subr.bf16.mxu0 0
    %1543 = vmatpush1.bf16.msra.mxu0 0
    %1544 = vmatprep.subr.bf16.mxu0 0
    %1545 = vmatpush1.bf16.msra.mxu0 0
    %1546 = vmatprep.subr.bf16.mxu0 0
    %1547 = vmatpush1.bf16.msra.mxu0 0
    %1548 = vmatprep.subr.bf16.mxu0 0
    %1549 = vmatpush1.bf16.msra.mxu0 0
    %1550 = vmatprep.subr.bf16.mxu0 0
    %1551 = vmatpush1.bf16.msra.mxu0 0
    %1552 = vmatprep.subr.bf16.mxu0 0
    %1553 = vmatpush1.bf16.msra.mxu0 0
    %1554 = vmatprep.subr.bf16.mxu0 0
    %1555 = vmatpush1.bf16.msra.mxu0 0
    %1556 = vmatprep.mubr.bf16.mxu0 0
    %1557 = vmatmul.mubr.bf16.gmra.mrb[0].mxu0 %v1522
    %v1558 = vpop.f32.mrb[0].mxu0
    %v1559 = vadd.f32 0.0, %v1558
    %v1560 = vpop.f32.mrb[0].mxu0
    %v1561 = vpop.f32.mrb[0].mxu0
    %v1562 = vadd.f32 0.0, %v1561
    %v1563 = vpop.f32.mrb[0].mxu0
    %1564 = vdwg.mxu0
    %1569 = vrot.lane.b32.xlu0 %v1019, 32
    %v1570 = vpop.permute.xlu0 %1569
    %1571 = vrot.lane.b32.xlu0 %v1022, 32
    %v1572 = vpop.permute.xlu0 %1571
    %1573 = vrot.lane.b32.xlu0 %v1067, 32
    %v1574 = vpop.permute.xlu0 %1573
    %1575 = vrot.lane.b32.xlu0 %v1070, 32
    %v1576 = vpop.permute.xlu0 %1575
    %1585 = vrot.lane.b32.xlu0 %v1266, 64
    %v1586 = vpop.permute.xlu0 %1585
    %1587 = vrot.lane.b32.xlu0 %v1269, 64
    %v1588 = vpop.permute.xlu0 %1587
    %1589 = vrot.lane.b32.xlu0 %v1313, 64
    %v1590 = vpop.permute.xlu0 %1589
    %1591 = vrot.lane.b32.xlu0 %v1316, 64
    %v1592 = vpop.permute.xlu0 %1591
    %1601 = vrot.lane.b32.xlu0 %v1512, 96
    %v1602 = vpop.permute.xlu0 %1601
    %1603 = vrot.lane.b32.xlu0 %v1515, 96
    %v1604 = vpop.permute.xlu0 %1603
    %1605 = vrot.lane.b32.xlu0 %v1559, 96
    %v1606 = vpop.permute.xlu0 %1605
    %1607 = vrot.lane.b32.xlu0 %v1562, 96
    %v1608 = vpop.permute.xlu0 %1607
    %v1613 = vsel %vm583, %v771, %v1570
    %v1614 = vsel %vm583, %v774, %v1572
    %v1615 = vsel %vm583, %v815, %v1574
    %v1616 = vsel %vm583, %v818, %v1576
    %vm1617 = vcmask 523264
    %v1618 = vsel %vm1617, %v1613, %v1586
    %v1619 = vsel %vm1617, %v1614, %v1588
    %v1620 = vsel %vm1617, %v1615, %v1590
    %v1621 = vsel %vm1617, %v1616, %v1592
    %vm1622 = vcmask 785408
    %v1623 = vsel %vm1622, %v1618, %v1602
    %v1624 = vsel %vm1622, %v1619, %v1604
    %v1625 = vsel %vm1622, %v1620, %v1606
    %v1626 = vsel %vm1622, %v1621, %v1608
    %v1627 = vpack.c.bf16 %v1624, %v1623
    %v1628 = vpack.c.bf16 %v1626, %v1625
    %v1629 = vld [vmem:[#allocation11] sm:$0xf]
    %v1630 = vld [vmem:[#allocation11 + $0x4] sm:$0xf]
    %v1631 = vld [vmem:[#allocation11 + $0x8] sm:$0xf]
    %v1632 = vld [vmem:[#allocation11 + $0xc] sm:$0xf]
    %v1633 = vld [vmem:[#allocation11 + $0x10] sm:$0xf]
    %v1634 = vld [vmem:[#allocation11 + $0x14] sm:$0xf]
    %v1635 = vld [vmem:[#allocation11 + $0x18] sm:$0xf]
    %v1636 = vld [vmem:[#allocation11 + $0x1c] sm:$0xf]
    %v1637 = vld [vmem:[#allocation11 + $0x20] sm:$0xf]
    %v1638 = vld [vmem:[#allocation11 + $0x24] sm:$0xf]
    %v1639 = vld [vmem:[#allocation11 + $0x28] sm:$0xf]
    %v1640 = vld [vmem:[#allocation11 + $0x2c] sm:$0xf]
    %v1641 = vld [vmem:[#allocation11 + $0x30] sm:$0xf]
    %v1642 = vld [vmem:[#allocation11 + $0x34] sm:$0xf]
    %v1643 = vld [vmem:[#allocation11 + $0x38] sm:$0xf]
    %v1644 = vld [vmem:[#allocation11 + $0x3c] sm:$0xf]
    %v1645 = vld [vmem:[#allocation13] sm:$0x1]
    %v1647 = vlaneseq
    %v1648 = vshrl.u32 %v1647, 7
    %v1649 = vsub.s32 0, %v1648
    %v1650 = vrot.slane %v1645, %v1649
    %v1668 = vunpack.c.l.b16 %v1629
    %v1669 = vunpack.c.l.b16 %v1630
    %v1670 = vunpack.c.l.b16 %v1631
    %v1671 = vunpack.c.l.b16 %v1632
    %v1672 = vunpack.c.l.b16 %v1633
    %v1673 = vunpack.c.l.b16 %v1634
    %v1674 = vunpack.c.l.b16 %v1635
    %v1675 = vunpack.c.l.b16 %v1636
    %v1676 = vunpack.c.l.b16 %v1637
    %v1677 = vunpack.c.l.b16 %v1638
    %v1678 = vunpack.c.l.b16 %v1639
    %v1679 = vunpack.c.l.b16 %v1640
    %v1680 = vunpack.c.l.b16 %v1641
    %v1681 = vunpack.c.l.b16 %v1642
    %v1682 = vunpack.c.l.b16 %v1643
    %v1683 = vunpack.c.l.b16 %v1644
    %v1684 = vpack.c.b16 %v1669, %v1668
    %v1685 = vpack.c.b16 %v1671, %v1670
    %v1686 = vpack.c.b16 %v1673, %v1672
    %v1687 = vpack.c.b16 %v1675, %v1674
    %v1688 = vpack.c.b16 %v1677, %v1676
    %v1689 = vpack.c.b16 %v1679, %v1678
    %v1690 = vpack.c.b16 %v1681, %v1680
    %v1691 = vpack.c.b16 %v1683, %v1682
    %1700 = vmatprep.subr.bf16.mxu0 0
    %1701 = vmatpush1.bf16.msra.mxu0 %v1684
    %1702 = vmatprep.subr.bf16.mxu0 0
    %1703 = vmatpush1.bf16.msra.mxu0 %v1685
    %1704 = vmatprep.subr.bf16.mxu0 0
    %1705 = vmatpush1.bf16.msra.mxu0 %v1686
    %1706 = vmatprep.subr.bf16.mxu0 0
    %1707 = vmatpush1.bf16.msra.mxu0 %v1687
    %1708 = vmatprep.subr.bf16.mxu0 0
    %1709 = vmatpush1.bf16.msra.mxu0 %v1688
    %1710 = vmatprep.subr.bf16.mxu0 0
    %1711 = vmatpush1.bf16.msra.mxu0 %v1689
    %1712 = vmatprep.subr.bf16.mxu0 0
    %1713 = vmatpush1.bf16.msra.mxu0 %v1690
    %1714 = vmatprep.subr.bf16.mxu0 0
    %1715 = vmatpush1.bf16.msra.mxu0 %v1691
    %1716 = vmatprep.subr.bf16.mxu0 0
    %1717 = vmatpush1.bf16.msra.mxu0 0
    %1718 = vmatprep.subr.bf16.mxu0 0
    %1719 = vmatpush1.bf16.msra.mxu0 0
    %1720 = vmatprep.subr.bf16.mxu0 0
    %1721 = vmatpush1.bf16.msra.mxu0 0
    %1722 = vmatprep.subr.bf16.mxu0 0
    %1723 = vmatpush1.bf16.msra.mxu0 0
    %1724 = vmatprep.subr.bf16.mxu0 0
    %1725 = vmatpush1.bf16.msra.mxu0 0
    %1726 = vmatprep.subr.bf16.mxu0 0
    %1727 = vmatpush1.bf16.msra.mxu0 0
    %1728 = vmatprep.subr.bf16.mxu0 0
    %1729 = vmatpush1.bf16.msra.mxu0 0
    %1730 = vmatprep.subr.bf16.mxu0 0
    %1731 = vmatpush1.bf16.msra.mxu0 0
    %1732 = vmatprep.mubr.bf16.mxu0 0
    %1733 = vmatmul.mubr.bf16.gmra.mrb[0].mxu0 %v1627
    %v1734 = vpop.f32.mrb[0].mxu0
    %v1735 = vadd.f32 %v1650, %v1734
    %v1736 = vpop.f32.mrb[0].mxu0
    %v1737 = vpop.f32.mrb[0].mxu0
    %v1738 = vadd.f32 %v1650, %v1737
    %v1739 = vpop.f32.mrb[0].mxu0
    %1740 = vmatprep.mubr.bf16.mxu0 0
    %1741 = vmatmul.mubr.bf16.gmra.mrb[0].mxu0 %v1628
    %v1742 = vpop.f32.mrb[0].mxu0
    %v1743 = vadd.f32 %v1650, %v1742
    %v1744 = vpop.f32.mrb[0].mxu0
    %v1745 = vpop.f32.mrb[0].mxu0
    %v1746 = vadd.f32 %v1650, %v1745
    %v1747 = vpop.f32.mrb[0].mxu0
    %1748 = vdwg.mxu0
    %v1749 = vadd.f32 %v1735, %v285
    %v1750 = vadd.f32 %v1738, %v286
    %v1751 = vadd.f32 %v1743, %v287
    %v1752 = vadd.f32 %v1746, %v288
    %v1753 = vld [vmem:[#allocation14] sm:$0x1]
    %v1754 = vld [vmem:[#allocation16] sm:$0x1]
    %1755 = vadd.xlane.f32.xlu0 %v1749
    %v1756 = vpop.xlane.xlu0 %1755
    %1757 = vadd.xlane.f32.xlu0 %v1750
    %v1758 = vpop.xlane.xlu0 %1757
    %1759 = vadd.xlane.f32.xlu0 %v1751
    %v1760 = vpop.xlane.xlu0 %1759
    %1761 = vadd.xlane.f32.xlu0 %v1752
    %v1762 = vpop.xlane.xlu0 %1761
    %v1763 = vmul.f32 %v1756, %v220
    %v1764 = vmul.f32 %v1758, %v220
    %v1765 = vmul.f32 %v1760, %v220
    %v1766 = vmul.f32 %v1762, %v220
    %v1767 = vmul.f32 %v1749, %v1749
    %v1768 = vmul.f32 %v1750, %v1750
    %v1769 = vmul.f32 %v1751, %v1751
    %v1770 = vmul.f32 %v1752, %v1752
    %1771 = vadd.xlane.f32.xlu0 %v1767
    %v1772 = vpop.xlane.xlu0 %1771
    %1773 = vadd.xlane.f32.xlu0 %v1768
    %v1774 = vpop.xlane.xlu0 %1773
    %1775 = vadd.xlane.f32.xlu0 %v1769
    %v1776 = vpop.xlane.xlu0 %1775
    %1777 = vadd.xlane.f32.xlu0 %v1770
    %v1778 = vpop.xlane.xlu0 %1777
    %v1779 = vmul.f32 %v1772, %v220
    %v1780 = vmul.f32 %v1774, %v220
    %v1781 = vmul.f32 %v1776, %v220
    %v1782 = vmul.f32 %v1778, %v220
    %v1783 = vmul.f32 %v1763, %v1763
    %v1784 = vmul.f32 %v1764, %v1764
    %v1785 = vmul.f32 %v1765, %v1765
    %v1786 = vmul.f32 %v1766, %v1766
    %v1787 = vsub.f32 %v1779, %v1783
    %v1788 = vsub.f32 %v1780, %v1784
    %v1789 = vsub.f32 %v1781, %v1785
    %v1790 = vsub.f32 %v1782, %v1786
    %v1791 = vmax.f32 %v1787, 0.0
    %v1792 = vmax.f32 %v1788, 0.0
    %v1793 = vmax.f32 %v1789, 0.0
    %v1794 = vmax.f32 %v1790, 0.0
    %v1795 = vsub.f32 %v1749, %v1763
    %v1796 = vsub.f32 %v1750, %v1764
    %v1797 = vsub.f32 %v1751, %v1765
    %v1798 = vsub.f32 %v1752, %v1766
    %v1799 = vadd.f32 %v1791, 1e-05
    %v1800 = vadd.f32 %v1792, 1e-05
    %v1801 = vadd.f32 %v1793, 1e-05
    %v1802 = vadd.f32 %v1794, 1e-05
    %v1803 = vrsqrt.pop %v1799
    %v1804 = vrsqrt.pop %v1800
    %v1805 = vrsqrt.pop %v1801
    %v1806 = vrsqrt.pop %v1802
    %v1807 = vmul.f32 %v1795, %v1803
    %v1808 = vmul.f32 %v1796, %v1804
    %v1809 = vmul.f32 %v1797, %v1805
    %v1810 = vmul.f32 %v1798, %v1806
    %v1812 = vlaneseq
    %v1813 = vshrl.u32 %v1812, 7
    %v1814 = vsub.s32 0, %v1813
    %v1815 = vrot.slane %v1753, %v1814
    %v1817 = vmul.f32 %v1807, %v1815
    %v1818 = vmul.f32 %v1808, %v1815
    %v1819 = vmul.f32 %v1809, %v1815
    %v1820 = vmul.f32 %v1810, %v1815
    %v1822 = vlaneseq
    %v1823 = vshrl.u32 %v1822, 7
    %v1824 = vsub.s32 0, %v1823
    %v1825 = vrot.slane %v1754, %v1824
    %v1827 = vadd.f32 %v1817, %v1825
    %v1828 = vadd.f32 %v1818, %v1825
    %v1829 = vadd.f32 %v1819, %v1825
    %v1830 = vadd.f32 %v1820, %v1825
    %v1831 = vpack.c.bf16 %v1828, %v1827
    %v1832 = vpack.c.bf16 %v1830, %v1829
    %v1833 = vld [vmem:[#allocation17] sm:$0xf]
    %v1834 = vld [vmem:[#allocation17 + $0x4] sm:$0xf]
    %v1835 = vld [vmem:[#allocation17 + $0x8] sm:$0xf]
    %v1836 = vld [vmem:[#allocation17 + $0xc] sm:$0xf]
    %v1837 = vld [vmem:[#allocation17 + $0x10] sm:$0xf]
    %v1838 = vld [vmem:[#allocation17 + $0x14] sm:$0xf]
    %v1839 = vld [vmem:[#allocation17 + $0x18] sm:$0xf]
    %v1840 = vld [vmem:[#allocation17 + $0x1c] sm:$0xf]
    %v1841 = vld [vmem:[#allocation17 + $0x20] sm:$0xf]
    %v1842 = vld [vmem:[#allocation17 + $0x24] sm:$0xf]
    %v1843 = vld [vmem:[#allocation17 + $0x28] sm:$0xf]
    %v1844 = vld [vmem:[#allocation17 + $0x2c] sm:$0xf]
    %v1845 = vld [vmem:[#allocation17 + $0x30] sm:$0xf]
    %v1846 = vld [vmem:[#allocation17 + $0x34] sm:$0xf]
    %v1847 = vld [vmem:[#allocation17 + $0x38] sm:$0xf]
    %v1848 = vld [vmem:[#allocation17 + $0x3c] sm:$0xf]
    %v1849 = vld [vmem:[#allocation19] sm:$0x1]
    %v1851 = vlaneseq
    %v1852 = vshrl.u32 %v1851, 7
    %v1853 = vsub.s32 0, %v1852
    %v1854 = vrot.slane %v1849, %v1853
    %v1872 = vunpack.c.l.b16 %v1833
    %v1873 = vunpack.c.l.b16 %v1834
    %v1874 = vunpack.c.l.b16 %v1835
    %v1875 = vunpack.c.l.b16 %v1836
    %v1876 = vunpack.c.l.b16 %v1837
    %v1877 = vunpack.c.l.b16 %v1838
    %v1878 = vunpack.c.l.b16 %v1839
    %v1879 = vunpack.c.l.b16 %v1840
    %v1880 = vunpack.c.l.b16 %v1841
    %v1881 = vunpack.c.l.b16 %v1842
    %v1882 = vunpack.c.l.b16 %v1843
    %v1883 = vunpack.c.l.b16 %v1844
    %v1884 = vunpack.c.l.b16 %v1845
    %v1885 = vunpack.c.l.b16 %v1846
    %v1886 = vunpack.c.l.b16 %v1847
    %v1887 = vunpack.c.l.b16 %v1848
    %v1888 = vpack.c.b16 %v1873, %v1872
    %v1889 = vpack.c.b16 %v1875, %v1874
    %v1890 = vpack.c.b16 %v1877, %v1876
    %v1891 = vpack.c.b16 %v1879, %v1878
    %v1892 = vpack.c.b16 %v1881, %v1880
    %v1893 = vpack.c.b16 %v1883, %v1882
    %v1894 = vpack.c.b16 %v1885, %v1884
    %v1895 = vpack.c.b16 %v1887, %v1886
    %1904 = vmatprep.subr.bf16.mxu0 0
    %1905 = vmatpush1.bf16.msra.mxu0 %v1888
    %1906 = vmatprep.subr.bf16.mxu0 0
    %1907 = vmatpush1.bf16.msra.mxu0 %v1889
    %1908 = vmatprep.subr.bf16.mxu0 0
    %1909 = vmatpush1.bf16.msra.mxu0 %v1890
    %1910 = vmatprep.subr.bf16.mxu0 0
    %1911 = vmatpush1.bf16.msra.mxu0 %v1891
    %1912 = vmatprep.subr.bf16.mxu0 0
    %1913 = vmatpush1.bf16.msra.mxu0 %v1892
    %1914 = vmatprep.subr.bf16.mxu0 0
    %1915 = vmatpush1.bf16.msra.mxu0 %v1893
    %1916 = vmatprep.subr.bf16.mxu0 0
    %1917 = vmatpush1.bf16.msra.mxu0 %v1894
    %1918 = vmatprep.subr.bf16.mxu0 0
    %1919 = vmatpush1.bf16.msra.mxu0 %v1895
    %1920 = vmatprep.subr.bf16.mxu0 0
    %1921 = vmatpush1.bf16.msra.mxu0 0
    %1922 = vmatprep.subr.bf16.mxu0 0
    %1923 = vmatpush1.bf16.msra.mxu0 0
    %1924 = vmatprep.subr.bf16.mxu0 0
    %1925 = vmatpush1.bf16.msra.mxu0 0
    %1926 = vmatprep.subr.bf16.mxu0 0
    %1927 = vmatpush1.bf16.msra.mxu0 0
    %1928 = vmatprep.subr.bf16.mxu0 0
    %1929 = vmatpush1.bf16.msra.mxu0 0
    %1930 = vmatprep.subr.bf16.mxu0 0
    %1931 = vmatpush1.bf16.msra.mxu0 0
    %1932 = vmatprep.subr.bf16.mxu0 0
    %1933 = vmatpush1.bf16.msra.mxu0 0
    %1934 = vmatprep.subr.bf16.mxu0 0
    %1935 = vmatpush1.bf16.msra.mxu0 0
    %1936 = vmatprep.mubr.bf16.mxu0 0
    %1937 = vmatmul.mubr.bf16.gmra.mrb[0].mxu0 %v1831
    %v1938 = vpop.f32.mrb[0].mxu0
    %v1939 = vadd.f32 %v1854, %v1938
    %v1940 = vpop.f32.mrb[0].mxu0
    %v1941 = vpop.f32.mrb[0].mxu0
    %v1942 = vadd.f32 %v1854, %v1941
    %v1943 = vpop.f32.mrb[0].mxu0
    %1944 = vmatprep.mubr.bf16.mxu0 0
    %1945 = vmatmul.mubr.bf16.gmra.mrb[0].mxu0 %v1832
    %v1946 = vpop.f32.mrb[0].mxu0
    %v1947 = vadd.f32 %v1854, %v1946
    %v1948 = vpop.f32.mrb[0].mxu0
    %v1949 = vpop.f32.mrb[0].mxu0
    %v1950 = vadd.f32 %v1854, %v1949
    %v1951 = vpop.f32.mrb[0].mxu0
    %1952 = vdwg.mxu0
    %v1953 = vmax.f32 %v1939, 0.0
    %v1954 = vmax.f32 %v1942, 0.0
    %v1955 = vmax.f32 %v1947, 0.0
    %v1956 = vmax.f32 %v1950, 0.0
    %v1957 = vpack.c.bf16 %v1954, %v1953
    %v1958 = vpack.c.bf16 %v1956, %v1955
    %v1959 = vld [vmem:[#allocation20] sm:$0xf]
    %v1960 = vld [vmem:[#allocation20 + $0x4] sm:$0xf]
    %v1961 = vld [vmem:[#allocation20 + $0x8] sm:$0xf]
    %v1962 = vld [vmem:[#allocation20 + $0xc] sm:$0xf]
    %v1963 = vld [vmem:[#allocation20 + $0x10] sm:$0xf]
    %v1964 = vld [vmem:[#allocation20 + $0x14] sm:$0xf]
    %v1965 = vld [vmem:[#allocation20 + $0x18] sm:$0xf]
    %v1966 = vld [vmem:[#allocation20 + $0x1c] sm:$0xf]
    %v1967 = vld [vmem:[#allocation20 + $0x20] sm:$0xf]
    %v1968 = vld [vmem:[#allocation20 + $0x24] sm:$0xf]
    %v1969 = vld [vmem:[#allocation20 + $0x28] sm:$0xf]
    %v1970 = vld [vmem:[#allocation20 + $0x2c] sm:$0xf]
    %v1971 = vld [vmem:[#allocation20 + $0x30] sm:$0xf]
    %v1972 = vld [vmem:[#allocation20 + $0x34] sm:$0xf]
    %v1973 = vld [vmem:[#allocation20 + $0x38] sm:$0xf]
    %v1974 = vld [vmem:[#allocation20 + $0x3c] sm:$0xf]
    %v1975 = vld [vmem:[#allocation22] sm:$0x1]
    %v1977 = vlaneseq
    %v1978 = vshrl.u32 %v1977, 7
    %v1979 = vsub.s32 0, %v1978
    %v1980 = vrot.slane %v1975, %v1979
    %v1998 = vunpack.c.l.b16 %v1959
    %v1999 = vunpack.c.l.b16 %v1960
    %v2000 = vunpack.c.l.b16 %v1961
    %v2001 = vunpack.c.l.b16 %v1962
    %v2002 = vunpack.c.l.b16 %v1963
    %v2003 = vunpack.c.l.b16 %v1964
    %v2004 = vunpack.c.l.b16 %v1965
    %v2005 = vunpack.c.l.b16 %v1966
    %v2006 = vunpack.c.l.b16 %v1967
    %v2007 = vunpack.c.l.b16 %v1968
    %v2008 = vunpack.c.l.b16 %v1969
    %v2009 = vunpack.c.l.b16 %v1970
    %v2010 = vunpack.c.l.b16 %v1971
    %v2011 = vunpack.c.l.b16 %v1972
    %v2012 = vunpack.c.l.b16 %v1973
    %v2013 = vunpack.c.l.b16 %v1974
    %v2014 = vpack.c.b16 %v1999, %v1998
    %v2015 = vpack.c.b16 %v2001, %v2000
    %v2016 = vpack.c.b16 %v2003, %v2002
    %v2017 = vpack.c.b16 %v2005, %v2004
    %v2018 = vpack.c.b16 %v2007, %v2006
    %v2019 = vpack.c.b16 %v2009, %v2008
    %v2020 = vpack.c.b16 %v2011, %v2010
    %v2021 = vpack.c.b16 %v2013, %v2012
    %2030 = vmatprep.subr.bf16.mxu0 0
    %2031 = vmatpush1.bf16.msra.mxu0 %v2014
    %2032 = vmatprep.subr.bf16.mxu0 0
    %2033 = vmatpush1.bf16.msra.mxu0 %v2015
    %2034 = vmatprep.subr.bf16.mxu0 0
    %2035 = vmatpush1.bf16.msra.mxu0 %v2016
    %2036 = vmatprep.subr.bf16.mxu0 0
    %2037 = vmatpush1.bf16.msra.mxu0 %v2017
    %2038 = vmatprep.subr.bf16.mxu0 0
    %2039 = vmatpush1.bf16.msra.mxu0 %v2018
    %2040 = vmatprep.subr.bf16.mxu0 0
    %2041 = vmatpush1.bf16.msra.mxu0 %v2019
    %2042 = vmatprep.subr.bf16.mxu0 0
    %2043 = vmatpush1.bf16.msra.mxu0 %v2020
    %2044 = vmatprep.subr.bf16.mxu0 0
    %2045 = vmatpush1.bf16.msra.mxu0 %v2021
    %2046 = vmatprep.subr.bf16.mxu0 0
    %2047 = vmatpush1.bf16.msra.mxu0 0
    %2048 = vmatprep.subr.bf16.mxu0 0
    %2049 = vmatpush1.bf16.msra.mxu0 0
    %2050 = vmatprep.subr.bf16.mxu0 0
    %2051 = vmatpush1.bf16.msra.mxu0 0
    %2052 = vmatprep.subr.bf16.mxu0 0
    %2053 = vmatpush1.bf16.msra.mxu0 0
    %2054 = vmatprep.subr.bf16.mxu0 0
    %2055 = vmatpush1.bf16.msra.mxu0 0
    %2056 = vmatprep.subr.bf16.mxu0 0
    %2057 = vmatpush1.bf16.msra.mxu0 0
    %2058 = vmatprep.subr.bf16.mxu0 0
    %2059 = vmatpush1.bf16.msra.mxu0 0
    %2060 = vmatprep.subr.bf16.mxu0 0
    %2061 = vmatpush1.bf16.msra.mxu0 0
    %2062 = vmatprep.mubr.bf16.mxu0 0
    %2063 = vmatmul.mubr.bf16.gmra.mrb[0].mxu0 %v1957
    %v2064 = vpop.f32.mrb[0].mxu0
    %v2065 = vadd.f32 %v1980, %v2064
    %v2066 = vpop.f32.mrb[0].mxu0
    %v2067 = vpop.f32.mrb[0].mxu0
    %v2068 = vadd.f32 %v1980, %v2067
    %v2069 = vpop.f32.mrb[0].mxu0
    %2070 = vmatprep.mubr.bf16.mxu0 0
    %2071 = vmatmul.mubr.bf16.gmra.mrb[0].mxu0 %v1958
    %v2072 = vpop.f32.mrb[0].mxu0
    %v2073 = vadd.f32 %v1980, %v2072
    %v2074 = vpop.f32.mrb[0].mxu0
    %v2075 = vpop.f32.mrb[0].mxu0
    %v2076 = vadd.f32 %v1980, %v2075
    %v2077 = vpop.f32.mrb[0].mxu0
    %2078 = vdwg.mxu0
    %v2079 = vadd.f32 %v2065, %v1827
    %v2080 = vadd.f32 %v2068, %v1828
    %v2081 = vadd.f32 %v2073, %v1829
    %v2082 = vadd.f32 %v2076, %v1830
    %2083 = vst [vmem:[#allocation23] sm:$0xff] %v2079
    %2084 = vst [vmem:[#allocation23 + $0x8] sm:$0xff] %v2080
    %2085 = vst [vmem:[#allocation23 + $0x10] sm:$0xff] %v2081
    %2086 = vst [vmem:[#allocation23 + $0x18] sm:$0xff] %v2082
    // Predicated region
    $region106: #{tpu_custom_call.1} parent=1 // pred_check
      _
    $region107: #{tpu_custom_call.1} parent=1 // pred_check_branch
      %2088 = sbr.rel (0) target = $region109
    $region108: #{tpu_custom_call.1} parent=1 // pred_region
      %s2090 = ssub.s32 512, 512
      %2091 = vsyncadd [#allocation4], %s2090
      %s2092 = sshll.u32 [#allocation23], 4
      %s2093 = int_to_ptr.vmem [resolvable:$true] %s2092
      %2098 = dma.vmem_to_hbm [thread:$0]  %s2093, 512, %s13, [#allocation4], 128, 128, 8
    $region109: #{tpu_custom_call.1} parent=1 // pred_fallthru
      _
    // Predicated region
    $region110: #{tpu_custom_call.1} parent=1 // pred_check
      _
    $region111: #{tpu_custom_call.1} parent=1 // pred_check_branch
      %2100 = sbr.rel (0) target = $region113
    $region112: #{tpu_custom_call.1} parent=1 // pred_region
      %2101 = dma.done [#allocation4], 512
    $region113: #{tpu_custom_call.1} parent=1 // pred_fallthru
      _
    %2102 = vsyncpa [#allocation3], 1
    %2103 = vsyncpa [#allocation6], 1
    %2104 = vsyncpa [#allocation9], 1
    %2105 = vsyncpa [#allocation12], 1
    %2106 = vsyncpa [#allocation15], 1
    %2107 = vsyncpa [#allocation18], 1
    %2108 = vsyncpa [#allocation21], 1
    %2109 = vsyncpa [#allocation4], 1

</llo_original>
